<compile_context>
chip_gen: v5e
topology: v5e:2x2
jax: 0.10.0
libtpu: 0.0.40
codegen_flags: <defaults>
</compile_context>

<pallas_src>
import jax
import jax.numpy as jnp
from jax import lax
from jax.experimental import pallas as pl
from jax.experimental.pallas import tpu as pltpu

EPS = 1e-5          # nn.InstanceNorm2d default eps (affine=False)
DILS = (1, 5, 7)    # dilations / paddings of the three 3x3 branches
LANE = 128


def _fold_weights(params):
    """Fold the 1x1 'cat' conv into the 3x3 taps, dedup coincident shifts.

    Returns (shifts, w_stacked): shifts is a list of distinct (dy, dx) pairs,
    w_stacked is (Cout, len(shifts)*Cin + 1) — per-shift (Cout, Cin) blocks in
    shift order, plus the folded bias as the last column.
    """
    shifts, blocks, index = [], [], {}
    for b_i, d in enumerate(DILS):
        wb = params[f"w{d}"]          # (3, 3, Cin, Cout)  HWIO
        wc = params["wc"][b_i]        # (Cout, Cout)
        for ky in range(3):
            for kx in range(3):
                tap = (wb[ky, kx] @ wc).T            # (Cout, Cin)
                key = ((ky - 1) * d, (kx - 1) * d)
                if key in index:
                    blocks[index[key]] = blocks[index[key]] + tap
                else:
                    index[key] = len(shifts)
                    shifts.append(key)
                    blocks.append(tap)
    b_eff = (params["b1"] @ params["wc"][0]
             + params["b5"] @ params["wc"][1]
             + params["b7"] @ params["wc"][2]
             + params["bc"])                          # (Cout,)
    w_stacked = jnp.concatenate(blocks + [b_eff[:, None]], axis=1)
    return shifts, w_stacked


def _make_kernel(shifts, cin, cout, H, W, pad_lead, pad_trail):
    N = H * W
    n_shifts = len(shifts)
    ones_row = n_shifts * cin

    def kernel(x_hbm, w_ref, o_ref, xext_ref, im_ref, sem):
        b = pl.program_id(0)

        # DMA this batch element's (Cin, N) slab straight into the (lane-
        # aligned) interior of the zero-haloed scratch; while it is in flight,
        # zero only the two halo strips and write the constant bias row.
        cp = pltpu.make_async_copy(
            x_hbm.at[b], xext_ref.at[:, pl.ds(pad_lead, N)], sem)
        cp.start()
        xext_ref[:, :pad_lead] = jnp.zeros((cin, pad_lead), jnp.float32)
        xext_ref[:, pad_lead + N:] = jnp.zeros((cin, pad_trail), jnp.float32)
        im_ref[ones_row:ones_row + 1, :] = jnp.ones((1, N), jnp.float32)
        # In-kernel column index for the horizontal-wrap masks (no HBM masks).
        col = lax.broadcasted_iota(jnp.int32, (1, N), 1) % W
        cp.wait()

        # im2col: one contiguous lane-slice per distinct shift, masked for
        # dx != 0 (one compare per distinct dx, memoized at trace time).
        masks = {}
        for s, (dy, dx) in enumerate(shifts):
            xs = xext_ref[:, pl.ds(pad_lead + dy * W + dx, N)]   # (Cin, N)
            if dx != 0:
                if dx not in masks:
                    m = (col < W - dx) if dx > 0 else (col >= -dx)
                    masks[dx] = m.astype(jnp.float32)
                xs = xs * masks[dx]
            im_ref[s * cin:(s + 1) * cin, :] = xs

        # Single stacked MXU matmul (bias folded via the ones row), f32 acc.
        # f32 inputs on purpose: default multi-pass MXU path holds the 2e-4
        # accuracy budget; bf16 single-pass would not.
        z = jnp.dot(w_ref[...], im_ref[...],
                    preferred_element_type=jnp.float32)          # (Cout, N)

        # InstanceNorm2d (affine=False, biased var) + ReLU, two-pass stats.
        inv_n = 1.0 / N
        mean = jnp.sum(z, axis=1, keepdims=True) * inv_n
        d = z - mean
        var = jnp.sum(d * d, axis=1, keepdims=True) * inv_n
        o_ref[0] = jnp.maximum(d * lax.rsqrt(var + EPS), 0.0).astype(o_ref.dtype)

    return kernel


def mrb_block_pallas(x_nchw, params):
    """x_nchw: (B, Cin, H, W) float32  ->  (B, Cout, H, W) float32."""
    B, Cin, H, W = x_nchw.shape
    Cout = params["bc"].shape[0]
    N = H * W

    shifts, w_stacked = _fold_weights(params)
    n_shifts = len(shifts)                      # 25
    k_rows = n_shifts * Cin + 1                 # stacked contraction depth

    max_off = max(abs(dy) * W + abs(dx) for dy, dx in shifts)   # 7*W + 7
    pad_lead = ((max_off + LANE - 1) // LANE) * LANE            # lane-aligned halo
    pad_trail = pad_lead
    ltot = pad_lead + N + pad_trail

    x_flat = x_nchw.reshape(B, Cin, N)          # free reshape, stays NCHW order

    kernel = _make_kernel(shifts, Cin, Cout, H, W, pad_lead, pad_trail)

    cost = pl.CostEstimate(
        flops=2 * B * Cout * k_rows * N,
        transcendentals=B * Cout,
        bytes_accessed=4 * (x_flat.size + w_stacked.size + B * Cout * N))

    out = pl.pallas_call(
        kernel,
        out_shape=jax.ShapeDtypeStruct((B, Cout, N), x_nchw.dtype),
        grid=(B,),
        in_specs=[
            pl.BlockSpec(memory_space=pl.ANY),                 # x: raw HBM, manual DMA
            pl.BlockSpec((Cout, k_rows), lambda b: (0, 0)),    # stacked weights + bias
        ],
        out_specs=pl.BlockSpec((1, Cout, N), lambda b: (b, 0, 0)),
        scratch_shapes=[
            pltpu.VMEM((Cin, ltot), jnp.float32),   # zero-haloed flat input
            pltpu.VMEM((k_rows, N), jnp.float32),   # stacked im2col (+ ones row)
            pltpu.SemaphoreType.DMA(()),
        ],
        compiler_params=pltpu.CompilerParams(
            dimension_semantics=("parallel",),
            vmem_limit_bytes=32 * 1024 * 1024),
        cost_estimate=cost,
    )(x_flat, w_stacked)

    return out.reshape(B, Cout, H, W)           # free reshape, already NCHW


def mrb_block_ref(x_nchw, params):
    """Pure-JAX reference (lax conv) with identical semantics."""
    x = jnp.transpose(x_nchw, (0, 2, 3, 1))

    def conv(w, b, d):
        y = lax.conv_general_dilated(
            x, w, window_strides=(1, 1), padding=[(d, d), (d, d)],
            rhs_dilation=(d, d),
            dimension_numbers=("NHWC", "HWIO", "NHWC"))
        return y + b

    a1 = conv(params["w1"], params["b1"], 1)
    a5 = conv(params["w5"], params["b5"], 5)
    a7 = conv(params["w7"], params["b7"], 7)
    z = (jnp.einsum("bhwc,co->bhwo", a1, params["wc"][0])
         + jnp.einsum("bhwc,co->bhwo", a5, params["wc"][1])
         + jnp.einsum("bhwc,co->bhwo", a7, params["wc"][2])
         + params["bc"])
    mean = jnp.mean(z, axis=(1, 2), keepdims=True)
    var = jnp.mean((z - mean) ** 2, axis=(1, 2), keepdims=True)
    y = jnp.maximum((z - mean) * lax.rsqrt(var + EPS), 0.0)
    return jnp.transpose(y, (0, 3, 1, 2))


def init_params(key, c_in, c_out):
    ks = jax.random.split(key, 8)
    scale = 0.1
    return {
        "w1": scale * jax.random.normal(ks[0], (3, 3, c_in, c_out), jnp.float32),
        "b1": scale * jax.random.normal(ks[1], (c_out,), jnp.float32),
        "w5": scale * jax.random.normal(ks[2], (3, 3, c_in, c_out), jnp.float32),
        "b5": scale * jax.random.normal(ks[3], (c_out,), jnp.float32),
        "w7": scale * jax.random.normal(ks[4], (3, 3, c_in, c_out), jnp.float32),
        "b7": scale * jax.random.normal(ks[5], (c_out,), jnp.float32),
        # 1x1 conv over [conv1 | conv5 | conv7], split per-branch.
        "wc": scale * jax.random.normal(ks[6], (3, c_out, c_out), jnp.float32),
        "bc": scale * jax.random.normal(ks[7], (c_out,), jnp.float32),
    }


if __name__ == "__main__":
    key = jax.random.PRNGKey(0)
    k_x, k_p = jax.random.split(key)

    B, C_IN, C_OUT, H, W = 2, 4, 8, 16, 16
    x = jax.random.normal(k_x, (B, C_IN, H, W), jnp.float32)
    params = init_params(k_p, C_IN, C_OUT)

    y_kernel = jax.block_until_ready(mrb_block_pallas(x, params))
    y_ref = jax.block_until_ready(mrb_block_ref(x, params))

    assert y_kernel.shape == (B, C_OUT, H, W)
    max_err = float(jnp.max(jnp.abs(y_kernel - y_ref)))
    assert max_err < 2e-4, f"mismatch vs reference: {max_err}"

    print("KERNEL_OK")
</pallas_src>

<mosaic_0001>
module attributes {stable_mosaic.version = 11 : i64} {
  func.func @kernel(%arg0: i32, %arg1: memref<2x4x256xf32, #tpu.memory_space<any>>, %arg2: memref<8x101xf32, #tpu.memory_space<vmem>>, %arg3: memref<1x8x256xf32, #tpu.memory_space<vmem>>, %arg4: memref<4x512xf32, #tpu.memory_space<vmem>>, %arg5: memref<101x256xf32, #tpu.memory_space<vmem>>, %arg6: memref<!tpu.dma_semaphore, #tpu.memory_space<semaphore_mem>>) attributes {dimension_semantics = [#tpu.dimension_semantics<parallel>], iteration_bounds = array<i64: 2>, scalar_prefetch = 0 : i64, scratch_operands = 3 : i64, tpu.core_type = #tpu.core_type<tc>, window_params = [{}, {pipeline_mode = #tpu.pipeline_mode<synchronous>, transform_indices = @transform_1, window_bounds = array<i64: 8, 101>}, {transform_indices = @transform_2, window_bounds = array<i64: 1, 8, 256>}]} {
    %c0_i32 = arith.constant 0 : i32
    %c0_i32_0 = arith.constant 0 : i32
    %0 = tpu.memref_slice %arg1[%arg0, %c0_i32, %c0_i32_0] : memref<2x4x256xf32, #tpu.memory_space<any>> -> memref<1x4x256xf32, #tpu.memory_space<any>>
    %1 = tpu.memref_squeeze %0 : memref<1x4x256xf32, #tpu.memory_space<any>> -> memref<4x256xf32, #tpu.memory_space<any>>
    %c0_i32_1 = arith.constant 0 : i32
    %c128_i32 = arith.constant 128 : i32
    %2 = tpu.memref_slice %arg4[%c0_i32_1, %c128_i32] : memref<4x512xf32, #tpu.memory_space<vmem>> -> memref<4x256xf32, #tpu.memory_space<vmem>>
    tpu.enqueue_dma source(%1 : memref<4x256xf32, #tpu.memory_space<any>>) target(%2 : memref<4x256xf32, #tpu.memory_space<vmem>>) target_semaphore(%arg6 : memref<!tpu.dma_semaphore, #tpu.memory_space<semaphore_mem>>)
    %cst = arith.constant 0.000000e+00 : f32
    %3 = vector.broadcast %cst : f32 to vector<4x128xf32>
    %c0 = arith.constant 0 : index
    %c0_2 = arith.constant 0 : index
    %4 = vector.load %arg4[%c0, %c0_2] : memref<4x512xf32, #tpu.memory_space<vmem>>, vector<4x128xf32>
    tpu.vector_store %arg4[%c0, %c0_2], %3 {strides = array<i32>} : memref<4x512xf32, #tpu.memory_space<vmem>>, vector<4x128xf32>,
    %cst_3 = arith.constant 0.000000e+00 : f32
    %5 = vector.broadcast %cst_3 : f32 to vector<4x128xf32>
    %c0_4 = arith.constant 0 : index
    %c384 = arith.constant 384 : index
    %6 = vector.load %arg4[%c0_4, %c384] : memref<4x512xf32, #tpu.memory_space<vmem>>, vector<4x128xf32>
    tpu.vector_store %arg4[%c0_4, %c384], %5 {strides = array<i32>} : memref<4x512xf32, #tpu.memory_space<vmem>>, vector<4x128xf32>,
    %cst_5 = arith.constant 1.000000e+00 : f32
    %7 = vector.broadcast %cst_5 : f32 to vector<1x256xf32>
    %c100 = arith.constant 100 : index
    %c0_6 = arith.constant 0 : index
    %8 = vector.load %arg5[%c100, %c0_6] : memref<101x256xf32, #tpu.memory_space<vmem>>, vector<1x256xf32>
    tpu.vector_store %arg5[%c100, %c0_6], %7 {strides = array<i32>} : memref<101x256xf32, #tpu.memory_space<vmem>>, vector<1x256xf32>,
    %9 = tpu.iota {dimensions = array<i32: 1>} : vector<1x256xi32>
    %c16_i32 = arith.constant 16 : i32
    %c0_i32_7 = arith.constant 0 : i32
    %10 = arith.cmpi eq, %c16_i32, %c0_i32_7 : i32
    %c1_i32 = arith.constant 1 : i32
    %11 = arith.select %10, %c1_i32, %c16_i32 : i32
    %12 = vector.broadcast %11 : i32 to vector<1x256xi32>
    %13 = arith.remsi %9, %12 : vector<1x256xi32>
    %c0_i32_8 = arith.constant 0 : i32
    %14 = vector.broadcast %c0_i32_8 : i32 to vector<1x256xi32>
    %15 = arith.cmpi ne, %13, %14 : vector<1x256xi32>
    %c0_i32_9 = arith.constant 0 : i32
    %16 = vector.broadcast %c0_i32_9 : i32 to vector<1x256xi32>
    %17 = arith.cmpi slt, %13, %16 : vector<1x256xi32>
    %c0_i32_10 = arith.constant 0 : i32
    %18 = arith.cmpi slt, %11, %c0_i32_10 : i32
    %19 = vector.broadcast %18 : i1 to vector<1x256xi1>
    %20 = vector.broadcast %19 : vector<1x256xi1> to vector<1x256xi1>
    %21 = arith.xori %17, %20 : vector<1x256xi1>
    %22 = arith.andi %21, %15 : vector<1x256xi1>
    %23 = vector.broadcast %11 : i32 to vector<1x256xi32>
    %24 = arith.addi %13, %23 : vector<1x256xi32>
    %25 = arith.select %22, %24, %13 : vector<1x256xi1>, vector<1x256xi32>
    %c0_i32_11 = arith.constant 0 : i32
    %c0_i32_12 = arith.constant 0 : i32
    %26 = tpu.memref_slice %arg1[%arg0, %c0_i32_11, %c0_i32_12] : memref<2x4x256xf32, #tpu.memory_space<any>> -> memref<1x4x256xf32, #tpu.memory_space<any>>
    %27 = tpu.memref_squeeze %26 : memref<1x4x256xf32, #tpu.memory_space<any>> -> memref<4x256xf32, #tpu.memory_space<any>>
    %c0_i32_13 = arith.constant 0 : i32
    %c128_i32_14 = arith.constant 128 : i32
    %28 = tpu.memref_slice %arg4[%c0_i32_13, %c128_i32_14] : memref<4x512xf32, #tpu.memory_space<vmem>> -> memref<4x256xf32, #tpu.memory_space<vmem>>
    tpu.wait_dma2 semaphore(%arg6 : memref<!tpu.dma_semaphore, #tpu.memory_space<semaphore_mem>>) src(%27 : memref<4x256xf32, #tpu.memory_space<any>>) dst(%28 : memref<4x256xf32, #tpu.memory_space<vmem>>)
    %c0_15 = arith.constant 0 : index
    %c111 = arith.constant 111 : index
    %29 = vector.load %arg4[%c0_15, %c111] : memref<4x512xf32, #tpu.memory_space<vmem>>, vector<4x256xf32>
    %c1_i32_16 = arith.constant 1 : i32
    %30 = vector.broadcast %c1_i32_16 : i32 to vector<1x256xi32>
    %31 = arith.cmpi sge, %25, %30 : vector<1x256xi32>
    %32 = arith.extui %31 : vector<1x256xi1> to vector<1x256xi32>
    %33 = arith.sitofp %32 : vector<1x256xi32> to vector<1x256xf32>
    %34 = vector.broadcast %33 : vector<1x256xf32> to vector<4x256xf32>
    %35 = arith.mulf %29, %34 : vector<4x256xf32>
    %c0_17 = arith.constant 0 : index
    %c0_18 = arith.constant 0 : index
    %36 = vector.load %arg5[%c0_17, %c0_18] : memref<101x256xf32, #tpu.memory_space<vmem>>, vector<4x256xf32>
    tpu.vector_store %arg5[%c0_17, %c0_18], %35 {strides = array<i32>} : memref<101x256xf32, #tpu.memory_space<vmem>>, vector<4x256xf32>,
    %c0_19 = arith.constant 0 : index
    %c112 = arith.constant 112 : index
    %37 = vector.load %arg4[%c0_19, %c112] : memref<4x512xf32, #tpu.memory_space<vmem>>, vector<4x256xf32>
    %c4 = arith.constant 4 : index
    %c0_20 = arith.constant 0 : index
    %38 = vector.load %arg5[%c4, %c0_20] : memref<101x256xf32, #tpu.memory_space<vmem>>, vector<4x256xf32>
    tpu.vector_store %arg5[%c4, %c0_20], %37 {strides = array<i32>} : memref<101x256xf32, #tpu.memory_space<vmem>>, vector<4x256xf32>,
    %c0_21 = arith.constant 0 : index
    %c113 = arith.constant 113 : index
    %39 = vector.load %arg4[%c0_21, %c113] : memref<4x512xf32, #tpu.memory_space<vmem>>, vector<4x256xf32>
    %c15_i32 = arith.constant 15 : i32
    %40 = vector.broadcast %c15_i32 : i32 to vector<1x256xi32>
    %41 = arith.cmpi slt, %25, %40 : vector<1x256xi32>
    %42 = arith.extui %41 : vector<1x256xi1> to vector<1x256xi32>
    %43 = arith.sitofp %42 : vector<1x256xi32> to vector<1x256xf32>
    %44 = vector.broadcast %43 : vector<1x256xf32> to vector<4x256xf32>
    %45 = arith.mulf %39, %44 : vector<4x256xf32>
    %c8 = arith.constant 8 : index
    %c0_22 = arith.constant 0 : index
    %46 = vector.load %arg5[%c8, %c0_22] : memref<101x256xf32, #tpu.memory_space<vmem>>, vector<4x256xf32>
    tpu.vector_store %arg5[%c8, %c0_22], %45 {strides = array<i32>} : memref<101x256xf32, #tpu.memory_space<vmem>>, vector<4x256xf32>,
    %c0_23 = arith.constant 0 : index
    %c127 = arith.constant 127 : index
    %47 = vector.load %arg4[%c0_23, %c127] : memref<4x512xf32, #tpu.memory_space<vmem>>, vector<4x256xf32>
    %48 = vector.broadcast %33 : vector<1x256xf32> to vector<4x256xf32>
    %49 = arith.mulf %47, %48 : vector<4x256xf32>
    %c12 = arith.constant 12 : index
    %c0_24 = arith.constant 0 : index
    %50 = vector.load %arg5[%c12, %c0_24] : memref<101x256xf32, #tpu.memory_space<vmem>>, vector<4x256xf32>
    tpu.vector_store %arg5[%c12, %c0_24], %49 {strides = array<i32>} : memref<101x256xf32, #tpu.memory_space<vmem>>, vector<4x256xf32>,
    %c0_25 = arith.constant 0 : index
    %c128 = arith.constant 128 : index
    %51 = vector.load %arg4[%c0_25, %c128] : memref<4x512xf32, #tpu.memory_space<vmem>>, vector<4x256xf32>
    %c16 = arith.constant 16 : index
    %c0_26 = arith.constant 0 : index
    %52 = vector.load %arg5[%c16, %c0_26] : memref<101x256xf32, #tpu.memory_space<vmem>>, vector<4x256xf32>
    tpu.vector_store %arg5[%c16, %c0_26], %51 {strides = array<i32>} : memref<101x256xf32, #tpu.memory_space<vmem>>, vector<4x256xf32>,
    %c0_27 = arith.constant 0 : index
    %c129 = arith.constant 129 : index
    %53 = vector.load %arg4[%c0_27, %c129] : memref<4x512xf32, #tpu.memory_space<vmem>>, vector<4x256xf32>
    %54 = vector.broadcast %43 : vector<1x256xf32> to vector<4x256xf32>
    %55 = arith.mulf %53, %54 : vector<4x256xf32>
    %c20 = arith.constant 20 : index
    %c0_28 = arith.constant 0 : index
    %56 = vector.load %arg5[%c20, %c0_28] : memref<101x256xf32, #tpu.memory_space<vmem>>, vector<4x256xf32>
    tpu.vector_store %arg5[%c20, %c0_28], %55 {strides = array<i32>} : memref<101x256xf32, #tpu.memory_space<vmem>>, vector<4x256xf32>,
    %c0_29 = arith.constant 0 : index
    %c143 = arith.constant 143 : index
    %57 = vector.load %arg4[%c0_29, %c143] : memref<4x512xf32, #tpu.memory_space<vmem>>, vector<4x256xf32>
    %58 = vector.broadcast %33 : vector<1x256xf32> to vector<4x256xf32>
    %59 = arith.mulf %57, %58 : vector<4x256xf32>
    %c24 = arith.constant 24 : index
    %c0_30 = arith.constant 0 : index
    %60 = vector.load %arg5[%c24, %c0_30] : memref<101x256xf32, #tpu.memory_space<vmem>>, vector<4x256xf32>
    tpu.vector_store %arg5[%c24, %c0_30], %59 {strides = array<i32>} : memref<101x256xf32, #tpu.memory_space<vmem>>, vector<4x256xf32>,
    %c0_31 = arith.constant 0 : index
    %c144 = arith.constant 144 : index
    %61 = vector.load %arg4[%c0_31, %c144] : memref<4x512xf32, #tpu.memory_space<vmem>>, vector<4x256xf32>
    %c28 = arith.constant 28 : index
    %c0_32 = arith.constant 0 : index
    %62 = vector.load %arg5[%c28, %c0_32] : memref<101x256xf32, #tpu.memory_space<vmem>>, vector<4x256xf32>
    tpu.vector_store %arg5[%c28, %c0_32], %61 {strides = array<i32>} : memref<101x256xf32, #tpu.memory_space<vmem>>, vector<4x256xf32>,
    %c0_33 = arith.constant 0 : index
    %c145 = arith.constant 145 : index
    %63 = vector.load %arg4[%c0_33, %c145] : memref<4x512xf32, #tpu.memory_space<vmem>>, vector<4x256xf32>
    %64 = vector.broadcast %43 : vector<1x256xf32> to vector<4x256xf32>
    %65 = arith.mulf %63, %64 : vector<4x256xf32>
    %c32 = arith.constant 32 : index
    %c0_34 = arith.constant 0 : index
    %66 = vector.load %arg5[%c32, %c0_34] : memref<101x256xf32, #tpu.memory_space<vmem>>, vector<4x256xf32>
    tpu.vector_store %arg5[%c32, %c0_34], %65 {strides = array<i32>} : memref<101x256xf32, #tpu.memory_space<vmem>>, vector<4x256xf32>,
    %c0_35 = arith.constant 0 : index
    %c43 = arith.constant 43 : index
    %67 = vector.load %arg4[%c0_35, %c43] : memref<4x512xf32, #tpu.memory_space<vmem>>, vector<4x256xf32>
    %c5_i32 = arith.constant 5 : i32
    %68 = vector.broadcast %c5_i32 : i32 to vector<1x256xi32>
    %69 = arith.cmpi sge, %25, %68 : vector<1x256xi32>
    %70 = arith.extui %69 : vector<1x256xi1> to vector<1x256xi32>
    %71 = arith.sitofp %70 : vector<1x256xi32> to vector<1x256xf32>
    %72 = vector.broadcast %71 : vector<1x256xf32> to vector<4x256xf32>
    %73 = arith.mulf %67, %72 : vector<4x256xf32>
    %c36 = arith.constant 36 : index
    %c0_36 = arith.constant 0 : index
    %74 = vector.load %arg5[%c36, %c0_36] : memref<101x256xf32, #tpu.memory_space<vmem>>, vector<4x256xf32>
    tpu.vector_store %arg5[%c36, %c0_36], %73 {strides = array<i32>} : memref<101x256xf32, #tpu.memory_space<vmem>>, vector<4x256xf32>,
    %c0_37 = arith.constant 0 : index
    %c48 = arith.constant 48 : index
    %75 = vector.load %arg4[%c0_37, %c48] : memref<4x512xf32, #tpu.memory_space<vmem>>, vector<4x256xf32>
    %c40 = arith.constant 40 : index
    %c0_38 = arith.constant 0 : index
    %76 = vector.load %arg5[%c40, %c0_38] : memref<101x256xf32, #tpu.memory_space<vmem>>, vector<4x256xf32>
    tpu.vector_store %arg5[%c40, %c0_38], %75 {strides = array<i32>} : memref<101x256xf32, #tpu.memory_space<vmem>>, vector<4x256xf32>,
    %c0_39 = arith.constant 0 : index
    %c53 = arith.constant 53 : index
    %77 = vector.load %arg4[%c0_39, %c53] : memref<4x512xf32, #tpu.memory_space<vmem>>, vector<4x256xf32>
    %c11_i32 = arith.constant 11 : i32
    %78 = vector.broadcast %c11_i32 : i32 to vector<1x256xi32>
    %79 = arith.cmpi slt, %25, %78 : vector<1x256xi32>
    %80 = arith.extui %79 : vector<1x256xi1> to vector<1x256xi32>
    %81 = arith.sitofp %80 : vector<1x256xi32> to vector<1x256xf32>
    %82 = vector.broadcast %81 : vector<1x256xf32> to vector<4x256xf32>
    %83 = arith.mulf %77, %82 : vector<4x256xf32>
    %c44 = arith.constant 44 : index
    %c0_40 = arith.constant 0 : index
    %84 = vector.load %arg5[%c44, %c0_40] : memref<101x256xf32, #tpu.memory_space<vmem>>, vector<4x256xf32>
    tpu.vector_store %arg5[%c44, %c0_40], %83 {strides = array<i32>} : memref<101x256xf32, #tpu.memory_space<vmem>>, vector<4x256xf32>,
    %c0_41 = arith.constant 0 : index
    %c123 = arith.constant 123 : index
    %85 = vector.load %arg4[%c0_41, %c123] : memref<4x512xf32, #tpu.memory_space<vmem>>, vector<4x256xf32>
    %86 = vector.broadcast %71 : vector<1x256xf32> to vector<4x256xf32>
    %87 = arith.mulf %85, %86 : vector<4x256xf32>
    %c48_42 = arith.constant 48 : index
    %c0_43 = arith.constant 0 : index
    %88 = vector.load %arg5[%c48_42, %c0_43] : memref<101x256xf32, #tpu.memory_space<vmem>>, vector<4x256xf32>
    tpu.vector_store %arg5[%c48_42, %c0_43], %87 {strides = array<i32>} : memref<101x256xf32, #tpu.memory_space<vmem>>, vector<4x256xf32>,
    %c0_44 = arith.constant 0 : index
    %c133 = arith.constant 133 : index
    %89 = vector.load %arg4[%c0_44, %c133] : memref<4x512xf32, #tpu.memory_space<vmem>>, vector<4x256xf32>
    %90 = vector.broadcast %81 : vector<1x256xf32> to vector<4x256xf32>
    %91 = arith.mulf %89, %90 : vector<4x256xf32>
    %c52 = arith.constant 52 : index
    %c0_45 = arith.constant 0 : index
    %92 = vector.load %arg5[%c52, %c0_45] : memref<101x256xf32, #tpu.memory_space<vmem>>, vector<4x256xf32>
    tpu.vector_store %arg5[%c52, %c0_45], %91 {strides = array<i32>} : memref<101x256xf32, #tpu.memory_space<vmem>>, vector<4x256xf32>,
    %c0_46 = arith.constant 0 : index
    %c203 = arith.constant 203 : index
    %93 = vector.load %arg4[%c0_46, %c203] : memref<4x512xf32, #tpu.memory_space<vmem>>, vector<4x256xf32>
    %94 = vector.broadcast %71 : vector<1x256xf32> to vector<4x256xf32>
    %95 = arith.mulf %93, %94 : vector<4x256xf32>
    %c56 = arith.constant 56 : index
    %c0_47 = arith.constant 0 : index
    %96 = vector.load %arg5[%c56, %c0_47] : memref<101x256xf32, #tpu.memory_space<vmem>>, vector<4x256xf32>
    tpu.vector_store %arg5[%c56, %c0_47], %95 {strides = array<i32>} : memref<101x256xf32, #tpu.memory_space<vmem>>, vector<4x256xf32>,
    %c0_48 = arith.constant 0 : index
    %c208 = arith.constant 208 : index
    %97 = vector.load %arg4[%c0_48, %c208] : memref<4x512xf32, #tpu.memory_space<vmem>>, vector<4x256xf32>
    %c60 = arith.constant 60 : index
    %c0_49 = arith.constant 0 : index
    %98 = vector.load %arg5[%c60, %c0_49] : memref<101x256xf32, #tpu.memory_space<vmem>>, vector<4x256xf32>
    tpu.vector_store %arg5[%c60, %c0_49], %97 {strides = array<i32>} : memref<101x256xf32, #tpu.memory_space<vmem>>, vector<4x256xf32>,
    %c0_50 = arith.constant 0 : index
    %c213 = arith.constant 213 : index
    %99 = vector.load %arg4[%c0_50, %c213] : memref<4x512xf32, #tpu.memory_space<vmem>>, vector<4x256xf32>
    %100 = vector.broadcast %81 : vector<1x256xf32> to vector<4x256xf32>
    %101 = arith.mulf %99, %100 : vector<4x256xf32>
    %c64 = arith.constant 64 : index
    %c0_51 = arith.constant 0 : index
    %102 = vector.load %arg5[%c64, %c0_51] : memref<101x256xf32, #tpu.memory_space<vmem>>, vector<4x256xf32>
    tpu.vector_store %arg5[%c64, %c0_51], %101 {strides = array<i32>} : memref<101x256xf32, #tpu.memory_space<vmem>>, vector<4x256xf32>,
    %c0_52 = arith.constant 0 : index
    %c9 = arith.constant 9 : index
    %103 = vector.load %arg4[%c0_52, %c9] : memref<4x512xf32, #tpu.memory_space<vmem>>, vector<4x256xf32>
    %c7_i32 = arith.constant 7 : i32
    %104 = vector.broadcast %c7_i32 : i32 to vector<1x256xi32>
    %105 = arith.cmpi sge, %25, %104 : vector<1x256xi32>
    %106 = arith.extui %105 : vector<1x256xi1> to vector<1x256xi32>
    %107 = arith.sitofp %106 : vector<1x256xi32> to vector<1x256xf32>
    %108 = vector.broadcast %107 : vector<1x256xf32> to vector<4x256xf32>
    %109 = arith.mulf %103, %108 : vector<4x256xf32>
    %c68 = arith.constant 68 : index
    %c0_53 = arith.constant 0 : index
    %110 = vector.load %arg5[%c68, %c0_53] : memref<101x256xf32, #tpu.memory_space<vmem>>, vector<4x256xf32>
    tpu.vector_store %arg5[%c68, %c0_53], %109 {strides = array<i32>} : memref<101x256xf32, #tpu.memory_space<vmem>>, vector<4x256xf32>,
    %c0_54 = arith.constant 0 : index
    %c16_55 = arith.constant 16 : index
    %111 = vector.load %arg4[%c0_54, %c16_55] : memref<4x512xf32, #tpu.memory_space<vmem>>, vector<4x256xf32>
    %c72 = arith.constant 72 : index
    %c0_56 = arith.constant 0 : index
    %112 = vector.load %arg5[%c72, %c0_56] : memref<101x256xf32, #tpu.memory_space<vmem>>, vector<4x256xf32>
    tpu.vector_store %arg5[%c72, %c0_56], %111 {strides = array<i32>} : memref<101x256xf32, #tpu.memory_space<vmem>>, vector<4x256xf32>,
    %c0_57 = arith.constant 0 : index
    %c23 = arith.constant 23 : index
    %113 = vector.load %arg4[%c0_57, %c23] : memref<4x512xf32, #tpu.memory_space<vmem>>, vector<4x256xf32>
    %c9_i32 = arith.constant 9 : i32
    %114 = vector.broadcast %c9_i32 : i32 to vector<1x256xi32>
    %115 = arith.cmpi slt, %25, %114 : vector<1x256xi32>
    %116 = arith.extui %115 : vector<1x256xi1> to vector<1x256xi32>
    %117 = arith.sitofp %116 : vector<1x256xi32> to vector<1x256xf32>
    %118 = vector.broadcast %117 : vector<1x256xf32> to vector<4x256xf32>
    %119 = arith.mulf %113, %118 : vector<4x256xf32>
    %c76 = arith.constant 76 : index
    %c0_58 = arith.constant 0 : index
    %120 = vector.load %arg5[%c76, %c0_58] : memref<101x256xf32, #tpu.memory_space<vmem>>, vector<4x256xf32>
    tpu.vector_store %arg5[%c76, %c0_58], %119 {strides = array<i32>} : memref<101x256xf32, #tpu.memory_space<vmem>>, vector<4x256xf32>,
    %c0_59 = arith.constant 0 : index
    %c121 = arith.constant 121 : index
    %121 = vector.load %arg4[%c0_59, %c121] : memref<4x512xf32, #tpu.memory_space<vmem>>, vector<4x256xf32>
    %122 = vector.broadcast %107 : vector<1x256xf32> to vector<4x256xf32>
    %123 = arith.mulf %121, %122 : vector<4x256xf32>
    %c80 = arith.constant 80 : index
    %c0_60 = arith.constant 0 : index
    %124 = vector.load %arg5[%c80, %c0_60] : memref<101x256xf32, #tpu.memory_space<vmem>>, vector<4x256xf32>
    tpu.vector_store %arg5[%c80, %c0_60], %123 {strides = array<i32>} : memref<101x256xf32, #tpu.memory_space<vmem>>, vector<4x256xf32>,
    %c0_61 = arith.constant 0 : index
    %c135 = arith.constant 135 : index
    %125 = vector.load %arg4[%c0_61, %c135] : memref<4x512xf32, #tpu.memory_space<vmem>>, vector<4x256xf32>
    %126 = vector.broadcast %117 : vector<1x256xf32> to vector<4x256xf32>
    %127 = arith.mulf %125, %126 : vector<4x256xf32>
    %c84 = arith.constant 84 : index
    %c0_62 = arith.constant 0 : index
    %128 = vector.load %arg5[%c84, %c0_62] : memref<101x256xf32, #tpu.memory_space<vmem>>, vector<4x256xf32>
    tpu.vector_store %arg5[%c84, %c0_62], %127 {strides = array<i32>} : memref<101x256xf32, #tpu.memory_space<vmem>>, vector<4x256xf32>,
    %c0_63 = arith.constant 0 : index
    %c233 = arith.constant 233 : index
    %129 = vector.load %arg4[%c0_63, %c233] : memref<4x512xf32, #tpu.memory_space<vmem>>, vector<4x256xf32>
    %130 = vector.broadcast %107 : vector<1x256xf32> to vector<4x256xf32>
    %131 = arith.mulf %129, %130 : vector<4x256xf32>
    %c88 = arith.constant 88 : index
    %c0_64 = arith.constant 0 : index
    %132 = vector.load %arg5[%c88, %c0_64] : memref<101x256xf32, #tpu.memory_space<vmem>>, vector<4x256xf32>
    tpu.vector_store %arg5[%c88, %c0_64], %131 {strides = array<i32>} : memref<101x256xf32, #tpu.memory_space<vmem>>, vector<4x256xf32>,
    %c0_65 = arith.constant 0 : index
    %c240 = arith.constant 240 : index
    %133 = vector.load %arg4[%c0_65, %c240] : memref<4x512xf32, #tpu.memory_space<vmem>>, vector<4x256xf32>
    %c92 = arith.constant 92 : index
    %c0_66 = arith.constant 0 : index
    %134 = vector.load %arg5[%c92, %c0_66] : memref<101x256xf32, #tpu.memory_space<vmem>>, vector<4x256xf32>
    tpu.vector_store %arg5[%c92, %c0_66], %133 {strides = array<i32>} : memref<101x256xf32, #tpu.memory_space<vmem>>, vector<4x256xf32>,
    %c0_67 = arith.constant 0 : index
    %c247 = arith.constant 247 : index
    %135 = vector.load %arg4[%c0_67, %c247] : memref<4x512xf32, #tpu.memory_space<vmem>>, vector<4x256xf32>
    %136 = vector.broadcast %117 : vector<1x256xf32> to vector<4x256xf32>
    %137 = arith.mulf %135, %136 : vector<4x256xf32>
    %c96 = arith.constant 96 : index
    %c0_68 = arith.constant 0 : index
    %138 = vector.load %arg5[%c96, %c0_68] : memref<101x256xf32, #tpu.memory_space<vmem>>, vector<4x256xf32>
    tpu.vector_store %arg5[%c96, %c0_68], %137 {strides = array<i32>} : memref<101x256xf32, #tpu.memory_space<vmem>>, vector<4x256xf32>,
    %c0_69 = arith.constant 0 : index
    %c0_70 = arith.constant 0 : index
    %139 = vector.load %arg2[%c0_69, %c0_70] : memref<8x101xf32, #tpu.memory_space<vmem>>, vector<8x101xf32>
    %c0_71 = arith.constant 0 : index
    %c0_72 = arith.constant 0 : index
    %140 = vector.load %arg5[%c0_71, %c0_72] : memref<101x256xf32, #tpu.memory_space<vmem>>, vector<101x256xf32>
    %cst_73 = arith.constant dense<0.000000e+00> : vector<8x256xf32>
    %141 = tpu.matmul %139, %140, %cst_73 {dimension_numbers = #tpu.dot_dimension_numbers<[1], [0], [0], [1], [0, 0, 1, 1], [], []>} : vector<8x101xf32>, vector<101x256xf32>, vector<8x256xf32> -> vector<8x256xf32>
    %cst_74 = arith.constant dense<0.000000e+00> : vector<8xf32>
    %142 = vector.multi_reduction <add>, %141, %cst_74 [1] : vector<8x256xf32> to vector<8xf32>
    %143 = vector.shape_cast %142 : vector<8xf32> to vector<8x1xf32>
    %cst_75 = arith.constant 3.906250e-03 : f32
    %144 = vector.broadcast %cst_75 : f32 to vector<8x1xf32>
    %145 = arith.mulf %143, %144 : vector<8x1xf32>
    %146 = vector.broadcast %145 : vector<8x1xf32> to vector<8x256xf32>
    %147 = arith.subf %141, %146 : vector<8x256xf32>
    %148 = arith.mulf %147, %147 : vector<8x256xf32>
    %cst_76 = arith.constant dense<0.000000e+00> : vector<8xf32>
    %149 = vector.multi_reduction <add>, %148, %cst_76 [1] : vector<8x256xf32> to vector<8xf32>
    %150 = vector.shape_cast %149 : vector<8xf32> to vector<8x1xf32>
    %cst_77 = arith.constant 3.906250e-03 : f32
    %151 = vector.broadcast %cst_77 : f32 to vector<8x1xf32>
    %152 = arith.mulf %150, %151 : vector<8x1xf32>
    %cst_78 = arith.constant 9.99999974E-6 : f32
    %153 = vector.broadcast %cst_78 : f32 to vector<8x1xf32>
    %154 = arith.addf %152, %153 : vector<8x1xf32>
    %155 = math.rsqrt %154 : vector<8x1xf32>
    %156 = vector.broadcast %155 : vector<8x1xf32> to vector<8x256xf32>
    %157 = arith.mulf %147, %156 : vector<8x256xf32>
    %cst_79 = arith.constant 0.000000e+00 : f32
    %158 = vector.broadcast %cst_79 : f32 to vector<8x256xf32>
    %159 = arith.maximumf %157, %158 : vector<8x256xf32>
    %c0_80 = arith.constant 0 : index
    %c0_81 = arith.constant 0 : index
    %c0_82 = arith.constant 0 : index
    %160 = vector.load %arg3[%c0_80, %c0_81, %c0_82] : memref<1x8x256xf32, #tpu.memory_space<vmem>>, vector<1x8x256xf32>
    %161 = vector.shape_cast %160 : vector<1x8x256xf32> to vector<8x256xf32>
    %162 = vector.shape_cast %159 : vector<8x256xf32> to vector<1x8x256xf32>
    tpu.vector_store %arg3[%c0_80, %c0_81, %c0_82], %162 {strides = array<i32>} : memref<1x8x256xf32, #tpu.memory_space<vmem>>, vector<1x8x256xf32>,
    return
  }
  func.func @transform_1(%arg0: i32) -> (i32, i32) {
    %c0_i32 = arith.constant 0 : i32
    %c0_i32_0 = arith.constant 0 : i32
    %c0_i32_1 = arith.constant 0 : i32
    return %c0_i32, %c0_i32_0 : i32, i32
  }
  func.func @transform_2(%arg0: i32) -> (i32, i32, i32) {
    %c0_i32 = arith.constant 0 : i32
    %c0_i32_0 = arith.constant 0 : i32
    %c0_i32_1 = arith.constant 0 : i32
    return %arg0, %c0_i32, %c0_i32_0 : i32, i32, i32
  }
}

</mosaic_0001>

<llo_original>
// kernel: tpu_custom_call.1
$region0: #{tpu_custom_call.1}
  #allocation0 [shape = 'u32[]', space=smem, size = 0x4, offset = 0x4, fixed_abs, tag = 'smem constant byte address 0x4 - core index']
  #allocation1 [shape = 'u32[72,128]{1,0:T(1,128)}', space=vmem, size = 0x9000, scoped, tag = 'internal scratch']
  #allocation2 [shape = 'f32[4,512]{1,0:T(4,128)}', space=vmem, size = 0x2000, scoped, tag = 'scratch operand']
  #allocation3 [shape = 'f32[101,256]{1,0:T(8,128)}', space=vmem, size = 0x1a000, scoped, tag = 'scratch operand']
  #allocation4 [shape = 's32[1]{0}', space=sflag, size = 0x4, scoped, tag = 'scratch operand']
  #allocation9 [shape = 's32[]', space=sflag, size = 0x4, offset = 0, fixed_abs, tag = 'sflag constant byte address 0x0 - dummy sync flag']
  #allocation10 [shape = 's32[]', space=sflag, size = 0x4, offset = 0, fixed_abs, tag = 'sflag constant byte address 0x0 - dummy sync flag']
  #allocation11 [shape = 'u32[]', space=smem, size = 0x4, offset = 0x44, fixed_abs, tag = 'smem constant byte address 0x44 - assertion arg 0']
  #allocation12 [shape = 'u32[]', space=smem, size = 0x4, offset = 0x48, fixed_abs, tag = 'smem constant byte address 0x48 - assertion arg 1']
  %s0 = inlined_call_operand.hbm [shape: f32[2,4,256], index: 0, kind: input, shape index: {}]
  %s1 = inlined_call_operand.hbm [shape: f32[8,101], index: 1, kind: input, shape index: {}]
  %s2 = inlined_call_operand.hbm [shape: f32[2,8,256], index: 2, kind: output, shape index: {}]
  %s3 = sld [smem:[#allocation0]]
  $region45: #{tpu_custom_call.1} parent=0
    _
  %s5 = ssub.s32 1, %s3
  %s6 = scalar_select 0, %s5, %s3
  $region1: #{tpu_custom_call.1} parent=0
    #allocation5 [shape = 'u8[4096]{0}', space=vmem, size = 0x1000, scoped, tag = 'input window, operand 1, single buffered']
    #allocation6 [shape = 's32[2]{0}', space=sflag, size = 0x8, scoped, tag = 'scoped memory for tpu_custom_call.1']
    #allocation7 [shape = 's32[2]{0}', space=sflag, size = 0x8, scoped, tag = 'scoped memory for tpu_custom_call.1']
    #allocation8 [shape = 'u8[16384]{0}', space=vmem, size = 0x4000, scoped, tag = 'output window, operand 0']
    %7 = vsyncpa [#allocation6], 0
    %8 = vsyncpa [#allocation7], 0
    %s9 = scalar_lea.sflag [#allocation7], 1
    %10 = vsyncpa %s9, 0
    loop: start=0, step=1, limit=4
    $region2: #{tpu_custom_call.1} parent=1 // loop_pre_header
      _
    $region3: #{tpu_custom_call.1} parent=1 // loop_header
      %s12 = sphi 0, %s16
      %p13 = scmp.ge.s32.totalorder %s12, 4
      %s20 = sphi 0, %s20
      %s22 = sphi 0, %s20
      %s23 = sphi 0, %s22
      %s37 = sphi 0, %s23
      %s43 = sphi 0, %s45
      %s46 = sphi 0, %s43
      %s47 = sphi 0, %s46
      %s63 = sphi 0, %s47
    $region4: #{tpu_custom_call.1} parent=1 // loop_header_branch
      %15 = sbr.rel (%p13) target = $region8
    $region5: #{tpu_custom_call.1} parent=1 // loop_body
      %s17 = ssub.s32 %s12, 1
      %s18 = ssub.s32 %s12, 2
      %s19 = sadd.s32 %s12, 1
      %s21 = sadd.s32 %s20, 1
      %p24 = scmp.eq.s32.totalorder %s12, 1
      %p25 = scmp.ne.s32.totalorder %s20, %s22
      %p26 = scmp.eq.s32.totalorder %s12, 0
      %p27 = por %p25, %p26
      %p28 = scmp.ne.s32.totalorder %s20, %s22
      %p29 = scmp.eq.s32.totalorder %s17, 1
      %p30 = por %p28, %p29
      %p31 = scmp.ne.s32.totalorder %s22, %s23
      %p32 = scmp.eq.s32.totalorder %s17, 0
      %p33 = por %p31, %p32
      %p34 = scmp.ne.s32.totalorder %s22, %s23
      %p35 = scmp.eq.s32.totalorder %s18, 1
      %p36 = por %p34, %p35
      %p38 = scmp.ne.s32.totalorder %s23, %s37
      %p39 = scmp.eq.s32.totalorder %s18, 0
      %p40 = por %p38, %p39
      %s41 = ssub.s32 %s12, %s19
      %p42 = scmp.eq.s32.totalorder %s41, 0
      %s44 = sadd.s32 %s43, 1
      %s45 = scalar_select %p42, %s43, %s44
      %p48 = pneg %p42
      %p49 = scmp.eq.s32.totalorder %s12, 1
      %p50 = por %p48, %p49
      %p51 = scmp.ne.s32.totalorder %s43, %s46
      %p52 = scmp.eq.s32.totalorder %s12, 0
      %p53 = por %p51, %p52
      %p54 = scmp.ne.s32.totalorder %s43, %s46
      %p55 = scmp.eq.s32.totalorder %s17, 1
      %p56 = por %p54, %p55
      %p57 = scmp.ne.s32.totalorder %s46, %s47
      %p58 = scmp.eq.s32.totalorder %s17, 0
      %p59 = por %p57, %p58
      %p60 = scmp.ne.s32.totalorder %s46, %s47
      %p61 = scmp.eq.s32.totalorder %s18, 1
      %p62 = por %p60, %p61
      %p64 = scmp.ne.s32.totalorder %s47, %s63
      %p65 = scmp.eq.s32.totalorder %s18, 0
      %p66 = por %p64, %p65
      %p67 = scmp.le.s32.totalorder 1, %s12
      %p68 = scmp.lt.s32.totalorder %s12, 3
      %p69 = pnand %p67, %p68
      %p70 = pneg %p69
      // Predicated region
      $region9: #{tpu_custom_call.1} parent=5 // pred_check
        _
      $region10: #{tpu_custom_call.1} parent=5 // pred_check_branch
        %72 = sbr.rel (%p69) target = $region12
      $region11: #{tpu_custom_call.1} parent=5 // pred_region
        %s73 = ssub.s32 %s12, 1
        // Predicated region
        $region13: #{tpu_custom_call.1} parent=11 // pred_check
          %p74 = pneg %p33
        $region14: #{tpu_custom_call.1} parent=11 // pred_check_branch
          %76 = sbr.rel (%p74) target = $region16
        $region15: #{tpu_custom_call.1} parent=11 // pred_region
          %78 = vsyncadd [#allocation6], 0
          %s80 = sshll.u32 %s1, 4
          %s81 = int_to_ptr.hbm [resolvable:$true] %s80
          %s82 = sshll.u32 [#allocation5], 4
          %s83 = int_to_ptr.vmem [resolvable:$true] %s82
          %85 = dma.hbm_to_vmem [thread:$0]  %s81, 128, %s83, [#allocation6]
        $region16: #{tpu_custom_call.1} parent=11 // pred_fallthru
          _
      $region12: #{tpu_custom_call.1} parent=5 // pred_fallthru
        _
      %p86 = scmp.lt.s32.totalorder %s12, 2
      // Predicated region
      $region17: #{tpu_custom_call.1} parent=5 // pred_check
        %p87 = pneg %p86
      $region18: #{tpu_custom_call.1} parent=5 // pred_check_branch
        %89 = sbr.rel (%p87) target = $region20
      $region19: #{tpu_custom_call.1} parent=5 // pred_region
        _
      $region20: #{tpu_custom_call.1} parent=5 // pred_fallthru
        _
      %p90 = scmp.le.s32.totalorder 1, %s12
      %p91 = scmp.lt.s32.totalorder %s12, 3
      %p92 = pnand %p90, %p91
      %p93 = pneg %p92
      // Predicated region
      $region21: #{tpu_custom_call.1} parent=5 // pred_check
        _
      $region22: #{tpu_custom_call.1} parent=5 // pred_check_branch
        %95 = sbr.rel (%p92) target = $region24
      $region23: #{tpu_custom_call.1} parent=5 // pred_region
        %s96 = ssub.s32 %s12, 1
        // Predicated region
        $region25: #{tpu_custom_call.1} parent=23 // pred_check
          %p97 = pneg %p33
        $region26: #{tpu_custom_call.1} parent=23 // pred_check_branch
          %99 = sbr.rel (%p97) target = $region28
        $region27: #{tpu_custom_call.1} parent=23 // pred_region
          %101 = dma.done [#allocation6], 128
        $region28: #{tpu_custom_call.1} parent=23 // pred_fallthru
          _
        %p102 = pneg %p33
        %p103 = pneg %p30
        %p104 = pneg %p59
        %p105 = pneg %p56
        %s106 = sand.u32 %s46, 1
        %s107 = scalar_lea.sflag [#allocation7], %s106
        %s108 = sand.u32 %s46, 1
        %s109 = smul.addr %s108, 16
        %s110 = scalar_lea.vmem [#allocation8], %s109
        %s111 = smul.u32 %s17, 2
        %s112 = smul.addr %s111, 4
        %s113 = scalar_lea.hbm %s0, %s112
        %s114 = scalar_lea.vmem [#allocation2], 4
        // Predicated region
        $region29: #{tpu_custom_call.1} parent=23 // pred_check
          _
        $region30: #{tpu_custom_call.1} parent=23 // pred_check_branch
          %116 = sbr.rel target = $region32
        $region31: #{tpu_custom_call.1} parent=23 // pred_region
          %117 = sst [smem:[#allocation11]] [#allocation10]
          %118 = sst [smem:[#allocation12]] [#allocation9]
        $region32: #{tpu_custom_call.1} parent=23 // pred_fallthru
          _
        %120 = shalt.err (0)
        %s122 = sshll.u32 %s113, 4
        %s123 = int_to_ptr.hbm [resolvable:$true] %s122
        %s124 = sshll.u32 %s114, 4
        %s125 = int_to_ptr.vmem [resolvable:$true] %s124
        %127 = dma.hbm_to_vmem [thread:$0]  %s123, 128, %s125, [#allocation4]
        %128 = vst [vmem:[#allocation2] sm:$0xf] 0.0
        %129 = vst [vmem:[#allocation2 + $0xc] sm:$0xf] 0.0
        %v130 = vlaneseq
        %vm131 = vcmp.ge.s32.totalorder %v130, 0
        %vm132 = vcmp.lt.s32.totalorder %v130, 256
        %vm133 = vmand %vm131, %vm132
        %s134 = scalar_lea.vmem [#allocation3], 196
        %135 = vst.msk [vmem:[%s134] ss:$8 sm:$0x3] %vm133, 1.0
        %136 = vst.msk [vmem:[%s134] ss:$8 sm:$0x0] %vm133, 1.0
        %v137 = vlaneseq
        %v138 = vand.u32 %v137, 127
        %v139 = vadd.s32 %v138, 128
        %vm140 = vcmp.lt.s32.totalorder %v138, 0
        %v141 = vsub.s32 0, %v138
        %v142 = vsel %vm140, %v141, %v138
        %v143 = vshrl.u32 %v142, 4
        %v144 = vand.u32 %v142, 15
        %v145 = vsub.s32 0, %v144
        %v146 = vsel %vm140, %v145, %v144
        %vm147 = vcmp.lt.s32.totalorder %v139, 0
        %v148 = vsub.s32 0, %v139
        %v149 = vsel %vm147, %v148, %v139
        %v150 = vshrl.u32 %v149, 4
        %v151 = vand.u32 %v149, 15
        %v152 = vsub.s32 0, %v151
        %v153 = vsel %vm147, %v152, %v151
        %vm154 = vcmp.ne.s32.totalorder %v146, 0
        %vm155 = vcmp.ne.s32.totalorder %v153, 0
        %vm156 = vcmp.lt.s32.totalorder %v146, 0
        %vm157 = vcmp.lt.s32.totalorder %v153, 0
        %vm158 = vmand %vm156, %vm154
        %vm159 = vmand %vm157, %vm155
        %v160 = vadd.s32 %v146, 16
        %v161 = vadd.s32 %v153, 16
        %v162 = vsel %vm158, %v160, %v146
        %v163 = vsel %vm159, %v161, %v153
        %s164 = smul.u32 4, 1
        %s165 = smul.u32 %s164, 2
        %s166 = sshll.u32 %s165, 4
        %167 = dma.done [#allocation4], %s166
        %v168 = vld [vmem:[#allocation2] sm:$0xff]
        %v169 = vld [vmem:[#allocation2 + $0x8] sm:$0xf]
        %vm170 = vcmp.ge.s32.totalorder %v162, 1
        %vm171 = vcmp.ge.s32.totalorder %v163, 1
        %v172 = vsel %vm170, 1, 0
        %v173 = vsel %vm171, 1, 0
        %v174 = vcvt.s32.f32 %v172
        %v175 = vcvt.s32.f32 %v173
        %v178 = vrot.slane %v175, 4
        %vm179 = vcmask 1043456
        %v180 = vsel %vm179, %v174, %v178
        %181 = vrot.lane.b32.xlu0 %v180, 111
        %v182 = vpop.permute.xlu0 %181
        %v183 = vrot.slane %v182, 4
        %vm184 = vcmask 908288
        %v185 = vsel %vm184, %v183, %v182
        %v188 = vmul.f32 %v168, %v185
        %v189 = vmul.f32 %v169, %v183
        %192 = vst [vmem:[#allocation1] ss:$2 sm:$0xff] %v188
        %s193 = scalar_lea.vmem [#allocation1], 16
        %194 = vst [vmem:[%s193] ss:$2 sm:$0xff] %v189
        %v195 = vld.sshfl [vmem:[#allocation1] sm:$0xff pattern:$0x75316420]
        %v196 = vld.sshfl [vmem:[#allocation1 + $0x8] sm:$0xff pattern:$0x75316420]
        %v197 = vld.sshfl [vmem:[#allocation1 + $0x10] sm:$0xff pattern:$0x75316420]
        %198 = vrot.lane.b32.xlu0 %v195, 17
        %v199 = vpop.permute.xlu0 %198
        %200 = vrot.lane.b32.xlu0 %v196, 17
        %v201 = vpop.permute.xlu0 %200
        %202 = vrot.lane.b32.xlu0 %v197, 17
        %v203 = vpop.permute.xlu0 %202
        %vm204 = vcmask 138240
        %v205 = vsel %vm204, %v199, %v201
        %v206 = vsel %vm204, %v201, %v203
        %209 = vst [vmem:[#allocation3] sm:$0xf] %v205
        %210 = vst [vmem:[#allocation3 + $0x8] sm:$0xf] %v206
        %v211 = vld [vmem:[#allocation2] sm:$0xff]
        %v212 = vld [vmem:[#allocation2 + $0x8] sm:$0xf]
        %s215 = scalar_lea.vmem [#allocation1], 1
        %216 = vst [vmem:[%s215] ss:$2 sm:$0xff] %v211
        %s217 = scalar_lea.vmem [#allocation1], 17
        %218 = vst [vmem:[%s217] ss:$2 sm:$0xff] %v212
        %v219 = vld.sshfl [vmem:[#allocation1] sm:$0xff pattern:$0x75316420]
        %v220 = vld.sshfl [vmem:[#allocation1 + $0x8] sm:$0xff pattern:$0x75316420]
        %v221 = vld.sshfl [vmem:[#allocation1 + $0x10] sm:$0xff pattern:$0x75316420]
        %222 = vrot.lane.b32.xlu0 %v219, 16
        %v223 = vpop.permute.xlu0 %222
        %224 = vrot.lane.b32.xlu0 %v220, 16
        %v225 = vpop.permute.xlu0 %224
        %226 = vrot.lane.b32.xlu0 %v221, 16
        %v227 = vpop.permute.xlu0 %226
        %vm228 = vcmask 130048
        %v229 = vsel %vm228, %v223, %v225
        %v230 = vsel %vm228, %v225, %v227
        %233 = vst [vmem:[#allocation3] sm:$0xf0] %v229
        %234 = vst [vmem:[#allocation3 + $0x8] sm:$0xf0] %v230
        %v235 = vld [vmem:[#allocation2] sm:$0xff]
        %v236 = vld [vmem:[#allocation2 + $0x8] sm:$0xf]
        %vm237 = vcmp.lt.s32.totalorder %v162, 15
        %vm238 = vcmp.lt.s32.totalorder %v163, 15
        %v239 = vsel %vm237, 1, 0
        %v240 = vsel %vm238, 1, 0
        %v241 = vcvt.s32.f32 %v239
        %v242 = vcvt.s32.f32 %v240
        %v245 = vrot.slane %v242, 4
        %v246 = vsel %vm179, %v241, %v245
        %247 = vrot.lane.b32.xlu0 %v246, 113
        %v248 = vpop.permute.xlu0 %247
        %v249 = vrot.slane %v248, 4
        %vm250 = vcmask 924672
        %v251 = vsel %vm250, %v249, %v248
        %v254 = vmul.f32 %v235, %v251
        %v255 = vmul.f32 %v236, %v249
        %258 = vst [vmem:[#allocation1] ss:$2 sm:$0xff] %v254
        %s259 = scalar_lea.vmem [#allocation1], 16
        %260 = vst [vmem:[%s259] ss:$2 sm:$0xff] %v255
        %v261 = vld.sshfl [vmem:[#allocation1] sm:$0xff pattern:$0x75316420]
        %v262 = vld.sshfl [vmem:[#allocation1 + $0x8] sm:$0xff pattern:$0x75316420]
        %v263 = vld.sshfl [vmem:[#allocation1 + $0x10] sm:$0xff pattern:$0x75316420]
        %264 = vrot.lane.b32.xlu0 %v261, 15
        %v265 = vpop.permute.xlu0 %264
        %266 = vrot.lane.b32.xlu0 %v262, 15
        %v267 = vpop.permute.xlu0 %266
        %268 = vrot.lane.b32.xlu0 %v263, 15
        %v269 = vpop.permute.xlu0 %268
        %vm270 = vcmask 121856
        %v271 = vsel %vm270, %v265, %v267
        %v272 = vsel %vm270, %v267, %v269
        %275 = vst [vmem:[#allocation3 + $0x10] sm:$0xf] %v271
        %276 = vst [vmem:[#allocation3 + $0x18] sm:$0xf] %v272
        %v277 = vld [vmem:[#allocation2] sm:$0xff]
        %v278 = vld [vmem:[#allocation2 + $0x8] sm:$0xf]
        %279 = vrot.lane.b32.xlu0 %v180, 127
        %v280 = vpop.permute.xlu0 %279
        %v281 = vrot.slane %v280, 4
        %vm282 = vcmask 1039360
        %v283 = vsel %vm282, %v281, %v280
        %v286 = vmul.f32 %v277, %v283
        %v287 = vmul.f32 %v278, %v281
        %s290 = scalar_lea.vmem [#allocation1], 1
        %291 = vst [vmem:[%s290] ss:$2 sm:$0xff] %v286
        %s292 = scalar_lea.vmem [#allocation1], 17
        %293 = vst [vmem:[%s292] ss:$2 sm:$0xff] %v287
        %v294 = vld.sshfl [vmem:[#allocation1] sm:$0xff pattern:$0x75316420]
        %v295 = vld.sshfl [vmem:[#allocation1 + $0x8] sm:$0xff pattern:$0x75316420]
        %v296 = vld.sshfl [vmem:[#allocation1 + $0x10] sm:$0xff pattern:$0x75316420]
        %297 = vrot.lane.b32.xlu0 %v294, 1
        %v298 = vpop.permute.xlu0 %297
        %299 = vrot.lane.b32.xlu0 %v295, 1
        %v300 = vpop.permute.xlu0 %299
        %301 = vrot.lane.b32.xlu0 %v296, 1
        %v302 = vpop.permute.xlu0 %301
        %vm303 = vcmask 7168
        %v304 = vsel %vm303, %v298, %v300
        %v305 = vsel %vm303, %v300, %v302
        %308 = vst [vmem:[#allocation3 + $0x10] sm:$0xf0] %v304
        %309 = vst [vmem:[#allocation3 + $0x18] sm:$0xf0] %v305
        %v310 = vld [vmem:[#allocation2 + $0x4] sm:$0xff]
        %312 = vst [vmem:[#allocation1] ss:$2 sm:$0xff] %v310
        %v313 = vld.sshfl [vmem:[#allocation1] sm:$0xff pattern:$0x75316420]
        %v314 = vld.sshfl [vmem:[#allocation1 + $0x8] sm:$0xff pattern:$0x75316420]
        %317 = vst [vmem:[#allocation3 + $0x20] sm:$0xf] %v313
        %318 = vst [vmem:[#allocation3 + $0x28] sm:$0xf] %v314
        %v319 = vld [vmem:[#allocation2 + $0x4] sm:$0xff]
        %v320 = vld [vmem:[#allocation2 + $0xc] sm:$0xf]
        %321 = vrot.lane.b32.xlu0 %v246, 1
        %v322 = vpop.permute.xlu0 %321
        %v323 = vrot.slane %v322, 4
        %v324 = vsel %vm303, %v323, %v322
        %v327 = vmul.f32 %v319, %v324
        %v328 = vmul.f32 %v320, %v323
        %s331 = scalar_lea.vmem [#allocation1], 1
        %332 = vst [vmem:[%s331] ss:$2 sm:$0xff] %v327
        %s333 = scalar_lea.vmem [#allocation1], 17
        %334 = vst [vmem:[%s333] ss:$2 sm:$0xff] %v328
        %v335 = vld.sshfl [vmem:[#allocation1] sm:$0xff pattern:$0x75316420]
        %v336 = vld.sshfl [vmem:[#allocation1 + $0x8] sm:$0xff pattern:$0x75316420]
        %v337 = vld.sshfl [vmem:[#allocation1 + $0x10] sm:$0xff pattern:$0x75316420]
        %338 = vrot.lane.b32.xlu0 %v335, 127
        %v339 = vpop.permute.xlu0 %338
        %340 = vrot.lane.b32.xlu0 %v336, 127
        %v341 = vpop.permute.xlu0 %340
        %342 = vrot.lane.b32.xlu0 %v337, 127
        %v343 = vpop.permute.xlu0 %342
        %v344 = vsel %vm282, %v339, %v341
        %v345 = vsel %vm282, %v341, %v343
        %348 = vst [vmem:[#allocation3 + $0x20] sm:$0xf0] %v344
        %349 = vst [vmem:[#allocation3 + $0x28] sm:$0xf0] %v345
        %v350 = vld [vmem:[#allocation2 + $0x4] sm:$0xff]
        %v351 = vld [vmem:[#allocation2 + $0xc] sm:$0xf]
        %352 = vrot.lane.b32.xlu0 %v180, 15
        %v353 = vpop.permute.xlu0 %352
        %v354 = vrot.slane %v353, 4
        %v355 = vsel %vm270, %v354, %v353
        %v358 = vmul.f32 %v350, %v355
        %v359 = vmul.f32 %v351, %v354
        %362 = vst [vmem:[#allocation1] ss:$2 sm:$0xff] %v358
        %s363 = scalar_lea.vmem [#allocation1], 16
        %364 = vst [vmem:[%s363] ss:$2 sm:$0xff] %v359
        %v365 = vld.sshfl [vmem:[#allocation1] sm:$0xff pattern:$0x75316420]
        %v366 = vld.sshfl [vmem:[#allocation1 + $0x8] sm:$0xff pattern:$0x75316420]
        %v367 = vld.sshfl [vmem:[#allocation1 + $0x10] sm:$0xff pattern:$0x75316420]
        %368 = vrot.lane.b32.xlu0 %v365, 113
        %v369 = vpop.permute.xlu0 %368
        %370 = vrot.lane.b32.xlu0 %v366, 113
        %v371 = vpop.permute.xlu0 %370
        %372 = vrot.lane.b32.xlu0 %v367, 113
        %v373 = vpop.permute.xlu0 %372
        %v374 = vsel %vm250, %v369, %v371
        %v375 = vsel %vm250, %v371, %v373
        %378 = vst [vmem:[#allocation3 + $0x30] sm:$0xf] %v374
        %379 = vst [vmem:[#allocation3 + $0x38] sm:$0xf] %v375
        %v380 = vld [vmem:[#allocation2 + $0x4] sm:$0xff]
        %v381 = vld [vmem:[#allocation2 + $0xc] sm:$0xf]
        %s384 = scalar_lea.vmem [#allocation1], 1
        %385 = vst [vmem:[%s384] ss:$2 sm:$0xff] %v380
        %s386 = scalar_lea.vmem [#allocation1], 17
        %387 = vst [vmem:[%s386] ss:$2 sm:$0xff] %v381
        %v388 = vld.sshfl [vmem:[#allocation1] sm:$0xff pattern:$0x75316420]
        %v389 = vld.sshfl [vmem:[#allocation1 + $0x8] sm:$0xff pattern:$0x75316420]
        %v390 = vld.sshfl [vmem:[#allocation1 + $0x10] sm:$0xff pattern:$0x75316420]
        %391 = vrot.lane.b32.xlu0 %v388, 112
        %v392 = vpop.permute.xlu0 %391
        %393 = vrot.lane.b32.xlu0 %v389, 112
        %v394 = vpop.permute.xlu0 %393
        %395 = vrot.lane.b32.xlu0 %v390, 112
        %v396 = vpop.permute.xlu0 %395
        %vm397 = vcmask 916480
        %v398 = vsel %vm397, %v392, %v394
        %v399 = vsel %vm397, %v394, %v396
        %402 = vst [vmem:[#allocation3 + $0x30] sm:$0xf0] %v398
        %403 = vst [vmem:[#allocation3 + $0x38] sm:$0xf0] %v399
        %v404 = vld [vmem:[#allocation2 + $0x4] sm:$0xff]
        %v405 = vld [vmem:[#allocation2 + $0xc] sm:$0xf]
        %406 = vrot.lane.b32.xlu0 %v246, 17
        %v407 = vpop.permute.xlu0 %406
        %v408 = vrot.slane %v407, 4
        %v409 = vsel %vm204, %v408, %v407
        %v412 = vmul.f32 %v404, %v409
        %v413 = vmul.f32 %v405, %v408
        %416 = vst [vmem:[#allocation1] ss:$2 sm:$0xff] %v412
        %s417 = scalar_lea.vmem [#allocation1], 16
        %418 = vst [vmem:[%s417] ss:$2 sm:$0xff] %v413
        %v419 = vld.sshfl [vmem:[#allocation1] sm:$0xff pattern:$0x75316420]
        %v420 = vld.sshfl [vmem:[#allocation1 + $0x8] sm:$0xff pattern:$0x75316420]
        %v421 = vld.sshfl [vmem:[#allocation1 + $0x10] sm:$0xff pattern:$0x75316420]
        %422 = vrot.lane.b32.xlu0 %v419, 111
        %v423 = vpop.permute.xlu0 %422
        %424 = vrot.lane.b32.xlu0 %v420, 111
        %v425 = vpop.permute.xlu0 %424
        %426 = vrot.lane.b32.xlu0 %v421, 111
        %v427 = vpop.permute.xlu0 %426
        %v428 = vsel %vm184, %v423, %v425
        %v429 = vsel %vm184, %v425, %v427
        %432 = vst [vmem:[#allocation3 + $0x40] sm:$0xf] %v428
        %433 = vst [vmem:[#allocation3 + $0x48] sm:$0xf] %v429
        %v434 = vld [vmem:[#allocation2] sm:$0xff]
        %v435 = vld [vmem:[#allocation2 + $0x8] sm:$0xf]
        %vm436 = vcmp.ge.s32.totalorder %v162, 5
        %vm437 = vcmp.ge.s32.totalorder %v163, 5
        %v438 = vsel %vm436, 1, 0
        %v439 = vsel %vm437, 1, 0
        %v440 = vcvt.s32.f32 %v438
        %v441 = vcvt.s32.f32 %v439
        %v444 = vrot.slane %v441, 4
        %v445 = vsel %vm179, %v440, %v444
        %446 = vrot.lane.b32.xlu0 %v445, 43
        %v447 = vpop.permute.xlu0 %446
        %v448 = vrot.slane %v447, 4
        %vm449 = vcmask 351232
        %v450 = vsel %vm449, %v448, %v447
        %v453 = vmul.f32 %v434, %v450
        %v454 = vmul.f32 %v435, %v448
        %s457 = scalar_lea.vmem [#allocation1], 1
        %458 = vst [vmem:[%s457] ss:$2 sm:$0xff] %v453
        %s459 = scalar_lea.vmem [#allocation1], 17
        %460 = vst [vmem:[%s459] ss:$2 sm:$0xff] %v454
        %v461 = vld.sshfl [vmem:[#allocation1] sm:$0xff pattern:$0x75316420]
        %v462 = vld.sshfl [vmem:[#allocation1 + $0x8] sm:$0xff pattern:$0x75316420]
        %v463 = vld.sshfl [vmem:[#allocation1 + $0x10] sm:$0xff pattern:$0x75316420]
        %464 = vrot.lane.b32.xlu0 %v461, 85
        %v465 = vpop.permute.xlu0 %464
        %466 = vrot.lane.b32.xlu0 %v462, 85
        %v467 = vpop.permute.xlu0 %466
        %468 = vrot.lane.b32.xlu0 %v463, 85
        %v469 = vpop.permute.xlu0 %468
        %vm470 = vcmask 695296
        %v471 = vsel %vm470, %v465, %v467
        %v472 = vsel %vm470, %v467, %v469
        %475 = vst [vmem:[#allocation3 + $0x40] sm:$0xf0] %v471
        %476 = vst [vmem:[#allocation3 + $0x48] sm:$0xf0] %v472
        %v477 = vld [vmem:[#allocation2] sm:$0xff]
        %v478 = vld [vmem:[#allocation2 + $0x8] sm:$0xf]
        %481 = vst [vmem:[#allocation1] ss:$2 sm:$0xff] %v477
        %s482 = scalar_lea.vmem [#allocation1], 16
        %483 = vst [vmem:[%s482] ss:$2 sm:$0xff] %v478
        %v484 = vld.sshfl [vmem:[#allocation1] sm:$0xff pattern:$0x75316420]
        %v485 = vld.sshfl [vmem:[#allocation1 + $0x8] sm:$0xff pattern:$0x75316420]
        %v486 = vld.sshfl [vmem:[#allocation1 + $0x10] sm:$0xff pattern:$0x75316420]
        %487 = vrot.lane.b32.xlu0 %v484, 80
        %v488 = vpop.permute.xlu0 %487
        %489 = vrot.lane.b32.xlu0 %v485, 80
        %v490 = vpop.permute.xlu0 %489
        %491 = vrot.lane.b32.xlu0 %v486, 80
        %v492 = vpop.permute.xlu0 %491
        %vm493 = vcmask 654336
        %v494 = vsel %vm493, %v488, %v490
        %v495 = vsel %vm493, %v490, %v492
        %498 = vst [vmem:[#allocation3 + $0x50] sm:$0xf] %v494
        %499 = vst [vmem:[#allocation3 + $0x58] sm:$0xf] %v495
        %v500 = vld [vmem:[#allocation2] sm:$0xff]
        %v501 = vld [vmem:[#allocation2 + $0x8] sm:$0xf]
        %vm502 = vcmp.lt.s32.totalorder %v162, 11
        %vm503 = vcmp.lt.s32.totalorder %v163, 11
        %v504 = vsel %vm502, 1, 0
        %v505 = vsel %vm503, 1, 0
        %v506 = vcvt.s32.f32 %v504
        %v507 = vcvt.s32.f32 %v505
        %v510 = vrot.slane %v507, 4
        %v511 = vsel %vm179, %v506, %v510
        %512 = vrot.lane.b32.xlu0 %v511, 53
        %v513 = vpop.permute.xlu0 %512
        %v514 = vrot.slane %v513, 4
        %vm515 = vcmask 433152
        %v516 = vsel %vm515, %v514, %v513
        %v519 = vmul.f32 %v500, %v516
        %v520 = vmul.f32 %v501, %v514
        %s523 = scalar_lea.vmem [#allocation1], 1
        %524 = vst [vmem:[%s523] ss:$2 sm:$0xff] %v519
        %s525 = scalar_lea.vmem [#allocation1], 17
        %526 = vst [vmem:[%s525] ss:$2 sm:$0xff] %v520
        %v527 = vld.sshfl [vmem:[#allocation1] sm:$0xff pattern:$0x75316420]
        %v528 = vld.sshfl [vmem:[#allocation1 + $0x8] sm:$0xff pattern:$0x75316420]
        %v529 = vld.sshfl [vmem:[#allocation1 + $0x10] sm:$0xff pattern:$0x75316420]
        %530 = vrot.lane.b32.xlu0 %v527, 75
        %v531 = vpop.permute.xlu0 %530
        %532 = vrot.lane.b32.xlu0 %v528, 75
        %v533 = vpop.permute.xlu0 %532
        %534 = vrot.lane.b32.xlu0 %v529, 75
        %v535 = vpop.permute.xlu0 %534
        %vm536 = vcmask 613376
        %v537 = vsel %vm536, %v531, %v533
        %v538 = vsel %vm536, %v533, %v535
        %541 = vst [vmem:[#allocation3 + $0x50] sm:$0xf0] %v537
        %542 = vst [vmem:[#allocation3 + $0x58] sm:$0xf0] %v538
        %v543 = vld [vmem:[#allocation2] sm:$0xff]
        %v544 = vld [vmem:[#allocation2 + $0x8] sm:$0xf]
        %545 = vrot.lane.b32.xlu0 %v445, 123
        %v546 = vpop.permute.xlu0 %545
        %v547 = vrot.slane %v546, 4
        %vm548 = vcmask 1006592
        %v549 = vsel %vm548, %v547, %v546
        %v552 = vmul.f32 %v543, %v549
        %v553 = vmul.f32 %v544, %v547
        %556 = vst [vmem:[#allocation1] ss:$2 sm:$0xff] %v552
        %s557 = scalar_lea.vmem [#allocation1], 16
        %558 = vst [vmem:[%s557] ss:$2 sm:$0xff] %v553
        %v559 = vld.sshfl [vmem:[#allocation1] sm:$0xff pattern:$0x75316420]
        %v560 = vld.sshfl [vmem:[#allocation1 + $0x8] sm:$0xff pattern:$0x75316420]
        %v561 = vld.sshfl [vmem:[#allocation1 + $0x10] sm:$0xff pattern:$0x75316420]
        %562 = vrot.lane.b32.xlu0 %v559, 5
        %v563 = vpop.permute.xlu0 %562
        %564 = vrot.lane.b32.xlu0 %v560, 5
        %v565 = vpop.permute.xlu0 %564
        %566 = vrot.lane.b32.xlu0 %v561, 5
        %v567 = vpop.permute.xlu0 %566
        %vm568 = vcmask 39936
        %v569 = vsel %vm568, %v563, %v565
        %v570 = vsel %vm568, %v565, %v567
        %573 = vst [vmem:[#allocation3 + $0x60] sm:$0xf] %v569
        %574 = vst [vmem:[#allocation3 + $0x68] sm:$0xf] %v570
        %v575 = vld [vmem:[#allocation2 + $0x4] sm:$0xff]
        %v576 = vld [vmem:[#allocation2 + $0xc] sm:$0xf]
        %577 = vrot.lane.b32.xlu0 %v511, 5
        %v578 = vpop.permute.xlu0 %577
        %v579 = vrot.slane %v578, 4
        %v580 = vsel %vm568, %v579, %v578
        %v583 = vmul.f32 %v575, %v580
        %v584 = vmul.f32 %v576, %v579
        %s587 = scalar_lea.vmem [#allocation1], 1
        %588 = vst [vmem:[%s587] ss:$2 sm:$0xff] %v583
        %s589 = scalar_lea.vmem [#allocation1], 17
        %590 = vst [vmem:[%s589] ss:$2 sm:$0xff] %v584
        %v591 = vld.sshfl [vmem:[#allocation1] sm:$0xff pattern:$0x75316420]
        %v592 = vld.sshfl [vmem:[#allocation1 + $0x8] sm:$0xff pattern:$0x75316420]
        %v593 = vld.sshfl [vmem:[#allocation1 + $0x10] sm:$0xff pattern:$0x75316420]
        %594 = vrot.lane.b32.xlu0 %v591, 123
        %v595 = vpop.permute.xlu0 %594
        %596 = vrot.lane.b32.xlu0 %v592, 123
        %v597 = vpop.permute.xlu0 %596
        %598 = vrot.lane.b32.xlu0 %v593, 123
        %v599 = vpop.permute.xlu0 %598
        %v600 = vsel %vm548, %v595, %v597
        %v601 = vsel %vm548, %v597, %v599
        %604 = vst [vmem:[#allocation3 + $0x60] sm:$0xf0] %v600
        %605 = vst [vmem:[#allocation3 + $0x68] sm:$0xf0] %v601
        %v606 = vld [vmem:[#allocation2 + $0x4] sm:$0xff]
        %v607 = vld [vmem:[#allocation2 + $0xc] sm:$0xf]
        %608 = vrot.lane.b32.xlu0 %v445, 75
        %v609 = vpop.permute.xlu0 %608
        %v610 = vrot.slane %v609, 4
        %v611 = vsel %vm536, %v610, %v609
        %v614 = vmul.f32 %v606, %v611
        %v615 = vmul.f32 %v607, %v610
        %618 = vst [vmem:[#allocation1] ss:$2 sm:$0xff] %v614
        %s619 = scalar_lea.vmem [#allocation1], 16
        %620 = vst [vmem:[%s619] ss:$2 sm:$0xff] %v615
        %v621 = vld.sshfl [vmem:[#allocation1] sm:$0xff pattern:$0x75316420]
        %v622 = vld.sshfl [vmem:[#allocation1 + $0x8] sm:$0xff pattern:$0x75316420]
        %v623 = vld.sshfl [vmem:[#allocation1 + $0x10] sm:$0xff pattern:$0x75316420]
        %624 = vrot.lane.b32.xlu0 %v621, 53
        %v625 = vpop.permute.xlu0 %624
        %626 = vrot.lane.b32.xlu0 %v622, 53
        %v627 = vpop.permute.xlu0 %626
        %628 = vrot.lane.b32.xlu0 %v623, 53
        %v629 = vpop.permute.xlu0 %628
        %v630 = vsel %vm515, %v625, %v627
        %v631 = vsel %vm515, %v627, %v629
        %634 = vst [vmem:[#allocation3 + $0x70] sm:$0xf] %v630
        %635 = vst [vmem:[#allocation3 + $0x78] sm:$0xf] %v631
        %v636 = vld [vmem:[#allocation2 + $0x4] sm:$0xff]
        %v637 = vld [vmem:[#allocation2 + $0xc] sm:$0xf]
        %s640 = scalar_lea.vmem [#allocation1], 1
        %641 = vst [vmem:[%s640] ss:$2 sm:$0xff] %v636
        %s642 = scalar_lea.vmem [#allocation1], 17
        %643 = vst [vmem:[%s642] ss:$2 sm:$0xff] %v637
        %v644 = vld.sshfl [vmem:[#allocation1] sm:$0xff pattern:$0x75316420]
        %v645 = vld.sshfl [vmem:[#allocation1 + $0x8] sm:$0xff pattern:$0x75316420]
        %v646 = vld.sshfl [vmem:[#allocation1 + $0x10] sm:$0xff pattern:$0x75316420]
        %647 = vrot.lane.b32.xlu0 %v644, 48
        %v648 = vpop.permute.xlu0 %647
        %649 = vrot.lane.b32.xlu0 %v645, 48
        %v650 = vpop.permute.xlu0 %649
        %651 = vrot.lane.b32.xlu0 %v646, 48
        %v652 = vpop.permute.xlu0 %651
        %vm653 = vcmask 392192
        %v654 = vsel %vm653, %v648, %v650
        %v655 = vsel %vm653, %v650, %v652
        %658 = vst [vmem:[#allocation3 + $0x70] sm:$0xf0] %v654
        %659 = vst [vmem:[#allocation3 + $0x78] sm:$0xf0] %v655
        %v660 = vld [vmem:[#allocation2 + $0x4] sm:$0xff]
        %v661 = vld [vmem:[#allocation2 + $0xc] sm:$0xf]
        %662 = vrot.lane.b32.xlu0 %v511, 85
        %v663 = vpop.permute.xlu0 %662
        %v664 = vrot.slane %v663, 4
        %v665 = vsel %vm470, %v664, %v663
        %v668 = vmul.f32 %v660, %v665
        %v669 = vmul.f32 %v661, %v664
        %672 = vst [vmem:[#allocation1] ss:$2 sm:$0xff] %v668
        %s673 = scalar_lea.vmem [#allocation1], 16
        %674 = vst [vmem:[%s673] ss:$2 sm:$0xff] %v669
        %v675 = vld.sshfl [vmem:[#allocation1] sm:$0xff pattern:$0x75316420]
        %v676 = vld.sshfl [vmem:[#allocation1 + $0x8] sm:$0xff pattern:$0x75316420]
        %v677 = vld.sshfl [vmem:[#allocation1 + $0x10] sm:$0xff pattern:$0x75316420]
        %678 = vrot.lane.b32.xlu0 %v675, 43
        %v679 = vpop.permute.xlu0 %678
        %680 = vrot.lane.b32.xlu0 %v676, 43
        %v681 = vpop.permute.xlu0 %680
        %682 = vrot.lane.b32.xlu0 %v677, 43
        %v683 = vpop.permute.xlu0 %682
        %v684 = vsel %vm449, %v679, %v681
        %v685 = vsel %vm449, %v681, %v683
        %688 = vst [vmem:[#allocation3 + $0x80] sm:$0xf] %v684
        %689 = vst [vmem:[#allocation3 + $0x88] sm:$0xf] %v685
        %v690 = vld [vmem:[#allocation2] sm:$0xff]
        %v691 = vld [vmem:[#allocation2 + $0x8] sm:$0xf]
        %vm692 = vcmp.ge.s32.totalorder %v162, 7
        %vm693 = vcmp.ge.s32.totalorder %v163, 7
        %v694 = vsel %vm692, 1, 0
        %v695 = vsel %vm693, 1, 0
        %v696 = vcvt.s32.f32 %v694
        %v697 = vcvt.s32.f32 %v695
        %v700 = vrot.slane %v697, 4
        %v701 = vsel %vm179, %v696, %v700
        %702 = vrot.lane.b32.xlu0 %v701, 9
        %v703 = vpop.permute.xlu0 %702
        %v704 = vrot.slane %v703, 4
        %vm705 = vcmask 72704
        %v706 = vsel %vm705, %v704, %v703
        %v709 = vmul.f32 %v690, %v706
        %v710 = vmul.f32 %v691, %v704
        %s713 = scalar_lea.vmem [#allocation1], 1
        %714 = vst [vmem:[%s713] ss:$2 sm:$0xff] %v709
        %s715 = scalar_lea.vmem [#allocation1], 17
        %716 = vst [vmem:[%s715] ss:$2 sm:$0xff] %v710
        %v717 = vld.sshfl [vmem:[#allocation1] sm:$0xff pattern:$0x75316420]
        %v718 = vld.sshfl [vmem:[#allocation1 + $0x8] sm:$0xff pattern:$0x75316420]
        %v719 = vld.sshfl [vmem:[#allocation1 + $0x10] sm:$0xff pattern:$0x75316420]
        %720 = vrot.lane.b32.xlu0 %v717, 119
        %v721 = vpop.permute.xlu0 %720
        %722 = vrot.lane.b32.xlu0 %v718, 119
        %v723 = vpop.permute.xlu0 %722
        %724 = vrot.lane.b32.xlu0 %v719, 119
        %v725 = vpop.permute.xlu0 %724
        %vm726 = vcmask 973824
        %v727 = vsel %vm726, %v721, %v723
        %v728 = vsel %vm726, %v723, %v725
        %731 = vst [vmem:[#allocation3 + $0x80] sm:$0xf0] %v727
        %732 = vst [vmem:[#allocation3 + $0x88] sm:$0xf0] %v728
        %v733 = vld [vmem:[#allocation2] sm:$0xff]
        %v734 = vld [vmem:[#allocation2 + $0x8] sm:$0xf]
        %737 = vst [vmem:[#allocation1] ss:$2 sm:$0xff] %v733
        %s738 = scalar_lea.vmem [#allocation1], 16
        %739 = vst [vmem:[%s738] ss:$2 sm:$0xff] %v734
        %v740 = vld.sshfl [vmem:[#allocation1] sm:$0xff pattern:$0x75316420]
        %v741 = vld.sshfl [vmem:[#allocation1 + $0x8] sm:$0xff pattern:$0x75316420]
        %v742 = vld.sshfl [vmem:[#allocation1 + $0x10] sm:$0xff pattern:$0x75316420]
        %743 = vrot.lane.b32.xlu0 %v740, 112
        %v744 = vpop.permute.xlu0 %743
        %745 = vrot.lane.b32.xlu0 %v741, 112
        %v746 = vpop.permute.xlu0 %745
        %747 = vrot.lane.b32.xlu0 %v742, 112
        %v748 = vpop.permute.xlu0 %747
        %v749 = vsel %vm397, %v744, %v746
        %v750 = vsel %vm397, %v746, %v748
        %753 = vst [vmem:[#allocation3 + $0x90] sm:$0xf] %v749
        %754 = vst [vmem:[#allocation3 + $0x98] sm:$0xf] %v750
        %v755 = vld [vmem:[#allocation2] sm:$0xff]
        %v756 = vld [vmem:[#allocation2 + $0x8] sm:$0xf]
        %vm757 = vcmp.lt.s32.totalorder %v162, 9
        %vm758 = vcmp.lt.s32.totalorder %v163, 9
        %v759 = vsel %vm757, 1, 0
        %v760 = vsel %vm758, 1, 0
        %v761 = vcvt.s32.f32 %v759
        %v762 = vcvt.s32.f32 %v760
        %v765 = vrot.slane %v762, 4
        %v766 = vsel %vm179, %v761, %v765
        %767 = vrot.lane.b32.xlu0 %v766, 23
        %v768 = vpop.permute.xlu0 %767
        %v769 = vrot.slane %v768, 4
        %vm770 = vcmask 187392
        %v771 = vsel %vm770, %v769, %v768
        %v774 = vmul.f32 %v755, %v771
        %v775 = vmul.f32 %v756, %v769
        %s778 = scalar_lea.vmem [#allocation1], 1
        %779 = vst [vmem:[%s778] ss:$2 sm:$0xff] %v774
        %s780 = scalar_lea.vmem [#allocation1], 17
        %781 = vst [vmem:[%s780] ss:$2 sm:$0xff] %v775
        %v782 = vld.sshfl [vmem:[#allocation1] sm:$0xff pattern:$0x75316420]
        %v783 = vld.sshfl [vmem:[#allocation1 + $0x8] sm:$0xff pattern:$0x75316420]
        %v784 = vld.sshfl [vmem:[#allocation1 + $0x10] sm:$0xff pattern:$0x75316420]
        %785 = vrot.lane.b32.xlu0 %v782, 105
        %v786 = vpop.permute.xlu0 %785
        %787 = vrot.lane.b32.xlu0 %v783, 105
        %v788 = vpop.permute.xlu0 %787
        %789 = vrot.lane.b32.xlu0 %v784, 105
        %v790 = vpop.permute.xlu0 %789
        %vm791 = vcmask 859136
        %v792 = vsel %vm791, %v786, %v788
        %v793 = vsel %vm791, %v788, %v790
        %796 = vst [vmem:[#allocation3 + $0x90] sm:$0xf0] %v792
        %797 = vst [vmem:[#allocation3 + $0x98] sm:$0xf0] %v793
        %v798 = vld [vmem:[#allocation2] sm:$0xff]
        %v799 = vld [vmem:[#allocation2 + $0x8] sm:$0xf]
        %800 = vrot.lane.b32.xlu0 %v701, 121
        %v801 = vpop.permute.xlu0 %800
        %v802 = vrot.slane %v801, 4
        %vm803 = vcmask 990208
        %v804 = vsel %vm803, %v802, %v801
        %v807 = vmul.f32 %v798, %v804
        %v808 = vmul.f32 %v799, %v802
        %811 = vst [vmem:[#allocation1] ss:$2 sm:$0xff] %v807
        %s812 = scalar_lea.vmem [#allocation1], 16
        %813 = vst [vmem:[%s812] ss:$2 sm:$0xff] %v808
        %v814 = vld.sshfl [vmem:[#allocation1] sm:$0xff pattern:$0x75316420]
        %v815 = vld.sshfl [vmem:[#allocation1 + $0x8] sm:$0xff pattern:$0x75316420]
        %v816 = vld.sshfl [vmem:[#allocation1 + $0x10] sm:$0xff pattern:$0x75316420]
        %817 = vrot.lane.b32.xlu0 %v814, 7
        %v818 = vpop.permute.xlu0 %817
        %819 = vrot.lane.b32.xlu0 %v815, 7
        %v820 = vpop.permute.xlu0 %819
        %821 = vrot.lane.b32.xlu0 %v816, 7
        %v822 = vpop.permute.xlu0 %821
        %vm823 = vcmask 56320
        %v824 = vsel %vm823, %v818, %v820
        %v825 = vsel %vm823, %v820, %v822
        %828 = vst [vmem:[#allocation3 + $0xa0] sm:$0xf] %v824
        %829 = vst [vmem:[#allocation3 + $0xa8] sm:$0xf] %v825
        %v830 = vld [vmem:[#allocation2 + $0x4] sm:$0xff]
        %v831 = vld [vmem:[#allocation2 + $0xc] sm:$0xf]
        %832 = vrot.lane.b32.xlu0 %v766, 7
        %v833 = vpop.permute.xlu0 %832
        %v834 = vrot.slane %v833, 4
        %v835 = vsel %vm823, %v834, %v833
        %v838 = vmul.f32 %v830, %v835
        %v839 = vmul.f32 %v831, %v834
        %s842 = scalar_lea.vmem [#allocation1], 1
        %843 = vst [vmem:[%s842] ss:$2 sm:$0xff] %v838
        %s844 = scalar_lea.vmem [#allocation1], 17
        %845 = vst [vmem:[%s844] ss:$2 sm:$0xff] %v839
        %v846 = vld.sshfl [vmem:[#allocation1] sm:$0xff pattern:$0x75316420]
        %v847 = vld.sshfl [vmem:[#allocation1 + $0x8] sm:$0xff pattern:$0x75316420]
        %v848 = vld.sshfl [vmem:[#allocation1 + $0x10] sm:$0xff pattern:$0x75316420]
        %849 = vrot.lane.b32.xlu0 %v846, 121
        %v850 = vpop.permute.xlu0 %849
        %851 = vrot.lane.b32.xlu0 %v847, 121
        %v852 = vpop.permute.xlu0 %851
        %853 = vrot.lane.b32.xlu0 %v848, 121
        %v854 = vpop.permute.xlu0 %853
        %v855 = vsel %vm803, %v850, %v852
        %v856 = vsel %vm803, %v852, %v854
        %859 = vst [vmem:[#allocation3 + $0xa0] sm:$0xf0] %v855
        %860 = vst [vmem:[#allocation3 + $0xa8] sm:$0xf0] %v856
        %v861 = vld [vmem:[#allocation2 + $0x4] sm:$0xff]
        %v862 = vld [vmem:[#allocation2 + $0xc] sm:$0xf]
        %863 = vrot.lane.b32.xlu0 %v701, 105
        %v864 = vpop.permute.xlu0 %863
        %v865 = vrot.slane %v864, 4
        %v866 = vsel %vm791, %v865, %v864
        %v869 = vmul.f32 %v861, %v866
        %v870 = vmul.f32 %v862, %v865
        %873 = vst [vmem:[#allocation1] ss:$2 sm:$0xff] %v869
        %s874 = scalar_lea.vmem [#allocation1], 16
        %875 = vst [vmem:[%s874] ss:$2 sm:$0xff] %v870
        %v876 = vld.sshfl [vmem:[#allocation1] sm:$0xff pattern:$0x75316420]
        %v877 = vld.sshfl [vmem:[#allocation1 + $0x8] sm:$0xff pattern:$0x75316420]
        %v878 = vld.sshfl [vmem:[#allocation1 + $0x10] sm:$0xff pattern:$0x75316420]
        %879 = vrot.lane.b32.xlu0 %v876, 23
        %v880 = vpop.permute.xlu0 %879
        %881 = vrot.lane.b32.xlu0 %v877, 23
        %v882 = vpop.permute.xlu0 %881
        %883 = vrot.lane.b32.xlu0 %v878, 23
        %v884 = vpop.permute.xlu0 %883
        %v885 = vsel %vm770, %v880, %v882
        %v886 = vsel %vm770, %v882, %v884
        %889 = vst [vmem:[#allocation3 + $0xb0] sm:$0xf] %v885
        %890 = vst [vmem:[#allocation3 + $0xb8] sm:$0xf] %v886
        %v891 = vld [vmem:[#allocation2 + $0x4] sm:$0xff]
        %v892 = vld [vmem:[#allocation2 + $0xc] sm:$0xf]
        %s895 = scalar_lea.vmem [#allocation1], 1
        %896 = vst [vmem:[%s895] ss:$2 sm:$0xff] %v891
        %s897 = scalar_lea.vmem [#allocation1], 17
        %898 = vst [vmem:[%s897] ss:$2 sm:$0xff] %v892
        %v899 = vld.sshfl [vmem:[#allocation1] sm:$0xff pattern:$0x75316420]
        %v900 = vld.sshfl [vmem:[#allocation1 + $0x8] sm:$0xff pattern:$0x75316420]
        %v901 = vld.sshfl [vmem:[#allocation1 + $0x10] sm:$0xff pattern:$0x75316420]
        %902 = vrot.lane.b32.xlu0 %v899, 16
        %v903 = vpop.permute.xlu0 %902
        %904 = vrot.lane.b32.xlu0 %v900, 16
        %v905 = vpop.permute.xlu0 %904
        %906 = vrot.lane.b32.xlu0 %v901, 16
        %v907 = vpop.permute.xlu0 %906
        %v908 = vsel %vm228, %v903, %v905
        %v909 = vsel %vm228, %v905, %v907
        %912 = vst [vmem:[#allocation3 + $0xb0] sm:$0xf0] %v908
        %913 = vst [vmem:[#allocation3 + $0xb8] sm:$0xf0] %v909
        %v914 = vld [vmem:[#allocation2 + $0x4] sm:$0xff]
        %v915 = vld [vmem:[#allocation2 + $0xc] sm:$0xf]
        %916 = vrot.lane.b32.xlu0 %v766, 119
        %v917 = vpop.permute.xlu0 %916
        %v918 = vrot.slane %v917, 4
        %v919 = vsel %vm726, %v918, %v917
        %v922 = vmul.f32 %v914, %v919
        %v923 = vmul.f32 %v915, %v918
        %926 = vst [vmem:[#allocation1] ss:$2 sm:$0xff] %v922
        %s927 = scalar_lea.vmem [#allocation1], 16
        %928 = vst [vmem:[%s927] ss:$2 sm:$0xff] %v923
        %v929 = vld.sshfl [vmem:[#allocation1] sm:$0xff pattern:$0x75316420]
        %v930 = vld.sshfl [vmem:[#allocation1 + $0x8] sm:$0xff pattern:$0x75316420]
        %v931 = vld.sshfl [vmem:[#allocation1 + $0x10] sm:$0xff pattern:$0x75316420]
        %932 = vrot.lane.b32.xlu0 %v929, 9
        %v933 = vpop.permute.xlu0 %932
        %934 = vrot.lane.b32.xlu0 %v930, 9
        %v935 = vpop.permute.xlu0 %934
        %936 = vrot.lane.b32.xlu0 %v931, 9
        %v937 = vpop.permute.xlu0 %936
        %v938 = vsel %vm705, %v933, %v935
        %v939 = vsel %vm705, %v935, %v937
        %942 = vst [vmem:[#allocation3 + $0xc0] sm:$0xf] %v938
        %943 = vst [vmem:[#allocation3 + $0xc8] sm:$0xf] %v939
        %v944 = vld [vmem:[#allocation5] sm:$0xff]
        %v945 = vld [vmem:[#allocation3] sm:$0xff]
        %v946 = vld [vmem:[#allocation3 + $0x8] sm:$0xff]
        %v947 = vld [vmem:[#allocation3 + $0x10] sm:$0xff]
        %v948 = vld [vmem:[#allocation3 + $0x18] sm:$0xff]
        %v949 = vld [vmem:[#allocation3 + $0x20] sm:$0xff]
        %v950 = vld [vmem:[#allocation3 + $0x28] sm:$0xff]
        %v951 = vld [vmem:[#allocation3 + $0x30] sm:$0xff]
        %v952 = vld [vmem:[#allocation3 + $0x38] sm:$0xff]
        %v953 = vld [vmem:[#allocation3 + $0x40] sm:$0xff]
        %v954 = vld [vmem:[#allocation3 + $0x48] sm:$0xff]
        %v955 = vld [vmem:[#allocation3 + $0x50] sm:$0xff]
        %v956 = vld [vmem:[#allocation3 + $0x58] sm:$0xff]
        %v957 = vld [vmem:[#allocation3 + $0x60] sm:$0xff]
        %v958 = vld [vmem:[#allocation3 + $0x68] sm:$0xff]
        %v959 = vld [vmem:[#allocation3 + $0x70] sm:$0xff]
        %v960 = vld [vmem:[#allocation3 + $0x78] sm:$0xff]
        %v961 = vld [vmem:[#allocation3 + $0x80] sm:$0xff]
        %v962 = vld [vmem:[#allocation3 + $0x88] sm:$0xff]
        %v963 = vld [vmem:[#allocation3 + $0x90] sm:$0xff]
        %v964 = vld [vmem:[#allocation3 + $0x98] sm:$0xff]
        %v965 = vld [vmem:[#allocation3 + $0xa0] sm:$0xff]
        %v966 = vld [vmem:[#allocation3 + $0xa8] sm:$0xff]
        %v967 = vld [vmem:[#allocation3 + $0xb0] sm:$0xff]
        %v968 = vld [vmem:[#allocation3 + $0xb8] sm:$0xff]
        %v969 = vld [vmem:[#allocation3 + $0xc0] sm:$0x1f]
        %v970 = vld [vmem:[#allocation3 + $0xc8] sm:$0x1f]
        %vm971 = vcmask 826368
        %v973 = vsel %vm971, %v944, 0
        %vm975 = vcmask 1044480
        %v977 = vsel %vm975, %v969, 0
        %v980 = vsel %vm975, %v970, 0
        %982 = vmatpush.msra.mxu0 0.0
        %983 = vmatpush.msra.mxu0 0.0
        %984 = vmatpush.msra.mxu0 0.0
        %985 = vmatpush.msra.mxu0 %v977
        %986 = vmatpush.msra.mxu0 %v967
        %987 = vmatpush.msra.mxu0 %v965
        %988 = vmatpush.msra.mxu0 %v963
        %989 = vmatpush.msra.mxu0 %v961
        %990 = vmatpush.msra.mxu0 %v959
        %991 = vmatpush.msra.mxu0 %v957
        %992 = vmatpush.msra.mxu0 %v955
        %993 = vmatpush.msra.mxu0 %v953
        %994 = vmatpush.msra.mxu0 %v951
        %995 = vmatpush.msra.mxu0 %v949
        %996 = vmatpush.msra.mxu0 %v947
        %997 = vmatpush.msra.mxu0 %v945
        %998 = vmatmul.f32.gmra.mxu0 %v973
        %v999 = vpop.f32.mrf.mxu0
        %v1000 = vadd.f32 0.0, %v999
        %1001 = vdwg.mxu0
        %1002 = vmatpush.msra.mxu0 0.0
        %1003 = vmatpush.msra.mxu0 0.0
        %1004 = vmatpush.msra.mxu0 0.0
        %1005 = vmatpush.msra.mxu0 %v980
        %1006 = vmatpush.msra.mxu0 %v968
        %1007 = vmatpush.msra.mxu0 %v966
        %1008 = vmatpush.msra.mxu0 %v964
        %1009 = vmatpush.msra.mxu0 %v962
        %1010 = vmatpush.msra.mxu0 %v960
        %1011 = vmatpush.msra.mxu0 %v958
        %1012 = vmatpush.msra.mxu0 %v956
        %1013 = vmatpush.msra.mxu0 %v954
        %1014 = vmatpush.msra.mxu0 %v952
        %1015 = vmatpush.msra.mxu0 %v950
        %1016 = vmatpush.msra.mxu0 %v948
        %1017 = vmatpush.msra.mxu0 %v946
        %1018 = vmatmul.f32.gmra.mxu0 %v973
        %v1019 = vpop.f32.mrf.mxu0
        %v1020 = vadd.f32 0.0, %v1019
        %1021 = vdwg.mxu0
        %v1022 = vadd.f32 %v1000, %v1020
        %1023 = vadd.xlane.f32.xlu0 %v1022
        %v1024 = vpop.xlane.xlu0 %1023
        %v1025 = vmul.f32 %v1024, 0.00390625
        %v1026 = vsub.f32 %v1000, %v1025
        %v1027 = vsub.f32 %v1020, %v1025
        %v1028 = vmul.f32 %v1026, %v1026
        %v1029 = vmul.f32 %v1027, %v1027
        %v1030 = vadd.f32 %v1028, %v1029
        %1031 = vadd.xlane.f32.xlu0 %v1030
        %v1032 = vpop.xlane.xlu0 %1031
        %v1033 = vmul.f32 %v1032, 0.00390625
        %v1034 = vadd.f32 %v1033, 1e-05
        %v1035 = vrsqrt.pop %v1034
        %v1036 = vmul.f32 %v1035, %v1034
        %v1037 = vmul.f32 %v1036, %v1035
        %v1038 = vmul.f32 0.5, %v1037
        %v1039 = vsub.f32 1.5, %v1038
        %v1040 = vmul.f32 %v1035, %v1039
        %vm1041 = vweird.f32 %v1034
        %vm1042 = vweird.f32 %v1035
        %vm1043 = vmor %vm1041, %vm1042
        %v1044 = vsel %vm1043, %v1035, %v1040
        %v1045 = vmul.f32 %v1026, %v1044
        %v1046 = vmul.f32 %v1027, %v1044
        %v1047 = vmax.f32 %v1045, 0.0
        %v1048 = vmax.f32 %v1046, 0.0
        %1049 = vst [vmem:[%s110] sm:$0xff] %v1047
        %1050 = vst [vmem:[%s110 + $0x8] sm:$0xff] %v1048
        %s1051 = sand.u32 %s46, 1
        %s1052 = scalar_lea.sflag [#allocation7], %s1051
        %s1053 = sand.u32 %s46, 1
        %s1054 = smul.addr %s1053, 16
        %s1055 = scalar_lea.vmem [#allocation8], %s1054
        // Predicated region
        $region33: #{tpu_custom_call.1} parent=23 // pred_check
          %p1056 = pneg %p56
        $region34: #{tpu_custom_call.1} parent=23 // pred_check_branch
          %1058 = sbr.rel (%p1056) target = $region36
        $region35: #{tpu_custom_call.1} parent=23 // pred_region
          %1060 = vsyncadd %s1052, 0
          %s1061 = smul.addr %s17, 2
          %s1062 = smul.addr %s1061, 8
          %s1063 = scalar_lea.hbm %s2, %s1062
          %s1065 = sshll.u32 %s1055, 4
          %s1066 = int_to_ptr.vmem [resolvable:$true] %s1065
          %s1067 = sshll.u32 %s1063, 4
          %s1068 = int_to_ptr.hbm [resolvable:$true] %s1067
          %1070 = dma.vmem_to_hbm [thread:$0]  %s1066, 256, %s1068, %s1052
        $region36: #{tpu_custom_call.1} parent=23 // pred_fallthru
          _
      $region24: #{tpu_custom_call.1} parent=5 // pred_fallthru
        _
      %p1071 = scmp.le.s32.totalorder 2, %s12
      // Predicated region
      $region37: #{tpu_custom_call.1} parent=5 // pred_check
        %p1072 = pneg %p1071
      $region38: #{tpu_custom_call.1} parent=5 // pred_check_branch
        %1074 = sbr.rel (%p1072) target = $region40
      $region39: #{tpu_custom_call.1} parent=5 // pred_region
        %s1075 = ssub.s32 %s12, 2
        // Predicated region
        $region41: #{tpu_custom_call.1} parent=39 // pred_check
          %p1076 = pneg %p62
        $region42: #{tpu_custom_call.1} parent=39 // pred_check_branch
          %1078 = sbr.rel (%p1076) target = $region44
        $region43: #{tpu_custom_call.1} parent=39 // pred_region
          %s1079 = sand.u32 %s47, 1
          %s1080 = scalar_lea.sflag [#allocation7], %s1079
          %s1081 = sand.u32 %s47, 1
          %s1082 = smul.addr %s1081, 16
          %s1083 = scalar_lea.vmem [#allocation8], %s1082
          %1085 = dma.done %s1080, 256
        $region44: #{tpu_custom_call.1} parent=39 // pred_fallthru
          _
      $region40: #{tpu_custom_call.1} parent=5 // pred_fallthru
        _
    $region6: #{tpu_custom_call.1} parent=1 // loop_footer
      %s16 = sadd.s32 1, %s12
    $region7: #{tpu_custom_call.1} parent=1 // loop_footer_branch
      %11 = sbr.rel target = $region3
    $region8: #{tpu_custom_call.1} parent=1 // loop_exit
      _
    %1086 = vsyncpa [#allocation6], 1
    %s1087 = scalar_lea.sflag [#allocation6], 1
    %1088 = vsyncpa %s1087, 1
    %1089 = vsyncpa [#allocation7], 1
    %s1090 = scalar_lea.sflag [#allocation7], 1
    %1091 = vsyncpa %s1090, 1
  %1092 = vsyncmov [#allocation4]
  %s1093 = vpop.sfrf %1092
  %p1094 = scmp.eq.s32.totalorder %s1093, 0
  %p1095 = pneg %p1094
  %1097 = shalt.err (%p1095)

</llo_original>
